<compile_context>
chip_gen: v5e
topology: v5e:2x2
jax: 0.10.0
libtpu: 0.0.40
codegen_flags: <defaults>
</compile_context>

<pallas_src>
import functools

import jax
import jax.numpy as jnp
from jax import lax
from jax.experimental import pallas as pl
from jax.experimental.pallas import tpu as pltpu

EPS = 1e-5
LANE = 128     # output-channel padding -> lane-dense stores / full MXU tiles
K_ALIGN = 16   # bf16 sublane packing for the GEMM reduction dim


# ----------------------------- Pallas kernels ------------------------------

def conv_gemm_stats_kernel(p_ref, w_ref, y_ref, stats_ref):
    """One M tile of the im2col GEMM (bf16 MXU -> f32 accumulate).

    Stores y in bf16 (pass-2 re-read is half the bytes) and this tile's
    per-channel sum / sum-of-squares (f32, computed from the f32 dot result
    BEFORE the bf16 cast) into its own partial-stats block, so the M grid axis
    stays 'parallel' (no resident accumulator)."""
    y = jnp.dot(p_ref[...], w_ref[...], preferred_element_type=jnp.float32)
    y_ref[...] = y.astype(y_ref.dtype)
    s = jnp.concatenate(
        [jnp.sum(y, axis=0, keepdims=True),
         jnp.sum(y * y, axis=0, keepdims=True)], axis=0)
    stats_ref[...] = s.reshape(stats_ref.shape)


def conv_gemm_stats_ds_kernel(p_ref, w_ref, r_ref, wd_ref,
                              y_ref, yd_ref, stats_ref, statsd_ref):
    """conv2 GEMM + downsample 1x1 GEMM for the same M tile, both emitting
    per-tile partial stats (parallel-friendly)."""
    y = jnp.dot(p_ref[...], w_ref[...], preferred_element_type=jnp.float32)
    yd = jnp.dot(r_ref[...], wd_ref[...], preferred_element_type=jnp.float32)
    y_ref[...] = y.astype(y_ref.dtype)
    yd_ref[...] = yd.astype(yd_ref.dtype)
    s = jnp.concatenate(
        [jnp.sum(y, axis=0, keepdims=True),
         jnp.sum(y * y, axis=0, keepdims=True)], axis=0)
    sd = jnp.concatenate(
        [jnp.sum(yd, axis=0, keepdims=True),
         jnp.sum(yd * yd, axis=0, keepdims=True)], axis=0)
    stats_ref[...] = s.reshape(stats_ref.shape)
    statsd_ref[...] = sd.reshape(statsd_ref.shape)


# Pass-2: BN already folded into per-channel (scale, shift); the kernels are a
# pure lane-dense y*scale+shift (+res) / ReLU stream in f32.

def scale_shift_relu_kernel(y_ref, ss_ref, o_ref):
    y = y_ref[...].astype(jnp.float32)
    o_ref[...] = jnp.maximum(
        y * ss_ref[0:1, :] + ss_ref[1:2, :], 0.0).astype(o_ref.dtype)


def scale_shift_add_relu_kernel(y_ref, ss_ref, res_ref, o_ref):
    y = y_ref[...].astype(jnp.float32)
    out = y * ss_ref[0:1, :] + ss_ref[1:2, :] + res_ref[...].astype(jnp.float32)
    o_ref[...] = jnp.maximum(out, 0.0).astype(o_ref.dtype)


def scale_shift2_add_relu_kernel(y_ref, ss_ref, yd_ref, ssd_ref, o_ref):
    out = (y_ref[...].astype(jnp.float32) * ss_ref[0:1, :] + ss_ref[1:2, :]
           + yd_ref[...].astype(jnp.float32) * ssd_ref[0:1, :] + ssd_ref[1:2, :])
    o_ref[...] = jnp.maximum(out, 0.0).astype(o_ref.dtype)


# ----------------------------- pallas_call wrappers -------------------------

@functools.lru_cache(maxsize=None)
def _vmem_limit_bytes():
    """Per-generation scoped VMEM limit (v7x: 64 MiB/TC, v5e/v6e: 128 MiB)."""
    cap = 64 * 1024 * 1024                     # conservative default (v7x)
    try:
        cap = int(pltpu.get_tpu_info().vmem_capacity_bytes)
    except Exception:
        pass
    cap = max(cap, 32 * 1024 * 1024)
    return min(cap * 3 // 4, 96 * 1024 * 1024)


def _compiler_params(semantics):
    return pltpu.CompilerParams(dimension_semantics=semantics,
                                vmem_limit_bytes=_vmem_limit_bytes())


def _conv_gemm_stats(patches, weights, tm):
    m_pad, k_pad = patches.shape
    cout_pad = weights.shape[1]
    nt = m_pad // tm
    return pl.pallas_call(
        conv_gemm_stats_kernel,
        out_shape=(jax.ShapeDtypeStruct((m_pad, cout_pad), jnp.bfloat16),
                   jax.ShapeDtypeStruct((nt, 2, cout_pad), jnp.float32)),
        grid=(nt,),
        in_specs=[pl.BlockSpec((tm, k_pad), lambda i: (i, 0)),
                  pl.BlockSpec((k_pad, cout_pad), lambda i: (0, 0))],
        out_specs=(pl.BlockSpec((tm, cout_pad), lambda i: (i, 0)),
                   pl.BlockSpec((1, 2, cout_pad), lambda i: (i, 0, 0))),
        compiler_params=_compiler_params(("parallel",)),
    )(patches, weights)


def _conv_gemm_stats_ds(patches, weights, res, wd, tm):
    m_pad, k_pad = patches.shape
    cout_pad = weights.shape[1]
    cin_pad = res.shape[1]
    nt = m_pad // tm
    return pl.pallas_call(
        conv_gemm_stats_ds_kernel,
        out_shape=(jax.ShapeDtypeStruct((m_pad, cout_pad), jnp.bfloat16),
                   jax.ShapeDtypeStruct((m_pad, cout_pad), jnp.bfloat16),
                   jax.ShapeDtypeStruct((nt, 2, cout_pad), jnp.float32),
                   jax.ShapeDtypeStruct((nt, 2, cout_pad), jnp.float32)),
        grid=(nt,),
        in_specs=[pl.BlockSpec((tm, k_pad), lambda i: (i, 0)),
                  pl.BlockSpec((k_pad, cout_pad), lambda i: (0, 0)),
                  pl.BlockSpec((tm, cin_pad), lambda i: (i, 0)),
                  pl.BlockSpec((cin_pad, cout_pad), lambda i: (0, 0))],
        out_specs=(pl.BlockSpec((tm, cout_pad), lambda i: (i, 0)),
                   pl.BlockSpec((tm, cout_pad), lambda i: (i, 0)),
                   pl.BlockSpec((1, 2, cout_pad), lambda i: (i, 0, 0)),
                   pl.BlockSpec((1, 2, cout_pad), lambda i: (i, 0, 0))),
        compiler_params=_compiler_params(("parallel",)),
    )(patches, weights, res, wd)


def _scale_shift_relu(y, ss, tm, out_dtype):
    m_pad, cout_pad = y.shape
    return pl.pallas_call(
        scale_shift_relu_kernel,
        out_shape=jax.ShapeDtypeStruct((m_pad, cout_pad), out_dtype),
        grid=(m_pad // tm,),
        in_specs=[pl.BlockSpec((tm, cout_pad), lambda i: (i, 0)),
                  pl.BlockSpec((2, cout_pad), lambda i: (0, 0))],
        out_specs=pl.BlockSpec((tm, cout_pad), lambda i: (i, 0)),
        compiler_params=_compiler_params(("parallel",)),
    )(y, ss)


def _scale_shift_add_relu(y, ss, res, tm, out_dtype):
    m_pad, cout_pad = y.shape
    return pl.pallas_call(
        scale_shift_add_relu_kernel,
        out_shape=jax.ShapeDtypeStruct((m_pad, cout_pad), out_dtype),
        grid=(m_pad // tm,),
        in_specs=[pl.BlockSpec((tm, cout_pad), lambda i: (i, 0)),
                  pl.BlockSpec((2, cout_pad), lambda i: (0, 0)),
                  pl.BlockSpec((tm, cout_pad), lambda i: (i, 0))],
        out_specs=pl.BlockSpec((tm, cout_pad), lambda i: (i, 0)),
        compiler_params=_compiler_params(("parallel",)),
    )(y, ss, res)


def _scale_shift2_add_relu(y, ss, yd, ssd, tm, out_dtype):
    m_pad, cout_pad = y.shape
    return pl.pallas_call(
        scale_shift2_add_relu_kernel,
        out_shape=jax.ShapeDtypeStruct((m_pad, cout_pad), out_dtype),
        grid=(m_pad // tm,),
        in_specs=[pl.BlockSpec((tm, cout_pad), lambda i: (i, 0)),
                  pl.BlockSpec((2, cout_pad), lambda i: (0, 0)),
                  pl.BlockSpec((tm, cout_pad), lambda i: (i, 0)),
                  pl.BlockSpec((2, cout_pad), lambda i: (0, 0))],
        out_specs=pl.BlockSpec((tm, cout_pad), lambda i: (i, 0)),
        compiler_params=_compiler_params(("parallel",)),
    )(y, ss, yd, ssd)


# --------------------------------- glue --------------------------------------

def _round_up(x, m):
    return (x + m - 1) // m * m


def _choose_tile_m(m, row_bytes, vmem_limit):
    """Largest M tile whose double-buffered per-tile footprint fits in the
    per-generation VMEM budget; small-m handling keeps >=2 grid steps so the
    per-tile partial-stats path is exercised."""
    if m >= 1024:
        budget = int(0.35 * vmem_limit)   # leave room for weight / scale-shift blocks
        for tm in (1024, 512, 256, 128):
            if 2 * tm * row_bytes <= budget:
                return tm
        return 128
    if m >= 32:
        return _round_up(pl.cdiv(m, 2), 16)   # 16: bf16 sublane packing
    return _round_up(max(m, 1), 16)


def _pad2d(x, rows, cols):
    return jnp.pad(x, ((0, rows - x.shape[0]), (0, cols - x.shape[1])))


def _im2col(x_nhwc, ksize, stride, pad):
    """(N,H,W,C) -> patches (N*Ho*Wo, ksize*ksize*C), (kh,kw,c)-major.
    Preserves the input dtype (call with bf16 so the 9x expansion is bf16)."""
    n, h, w, c = x_nhwc.shape
    xp = jnp.pad(x_nhwc, ((0, 0), (pad, pad), (pad, pad), (0, 0)))
    ho = (h + 2 * pad - ksize) // stride + 1
    wo = (w + 2 * pad - ksize) // stride + 1
    cols = []
    for kh in range(ksize):
        for kw in range(ksize):
            cols.append(xp[:, kh:kh + stride * ho:stride,
                           kw:kw + stride * wo:stride, :])
    patches = jnp.stack(cols, axis=3)            # (N, Ho, Wo, K*K, C)
    return patches.reshape(n * ho * wo, ksize * ksize * c), (n, ho, wo)


def _oihw_to_gemm(w_oihw, k_pad, cout_pad):
    # (Cout, Cin, KH, KW) -> (KH*KW*Cin, Cout), padded, bf16 for the MXU.
    cout, cin, kh, kw = w_oihw.shape
    w = jnp.transpose(w_oihw, (2, 3, 1, 0)).reshape(kh * kw * cin, cout)
    return _pad2d(w, k_pad, cout_pad).astype(jnp.bfloat16)


def _fold_bn(partial_stats, gamma, beta, m_true, cout_pad):
    """Reduce per-tile partial stats and fold training-mode BN into a
    per-channel (scale, shift) pair.  Tiny (2 x Cout) XLA-level work."""
    cout = gamma.shape[0]
    stats = jnp.sum(partial_stats, axis=0)[:, :cout]          # (2, Cout) f32
    mean = stats[0] / m_true
    var = jnp.maximum(stats[1] / m_true - mean * mean, 0.0)   # cancellation guard
    scale = gamma * lax.rsqrt(var + EPS)
    shift = beta - mean * scale
    ss = jnp.stack([scale, shift])                            # (2, Cout)
    return jnp.pad(ss, ((0, 0), (0, cout_pad - cout)))        # zero-padded chans -> scale 0


def init_params(key, in_channels, out_channels, stride):
    ks = jax.random.split(key, 12)
    p = {
        "w1": 0.1 * jax.random.normal(ks[0], (out_channels, in_channels, 3, 3), jnp.float32),
        "b1": 0.1 * jax.random.normal(ks[1], (out_channels,), jnp.float32),
        "g1": 1.0 + 0.1 * jax.random.normal(ks[2], (out_channels,), jnp.float32),
        "be1": 0.1 * jax.random.normal(ks[3], (out_channels,), jnp.float32),
        "w2": 0.1 * jax.random.normal(ks[4], (out_channels, out_channels, 3, 3), jnp.float32),
        "b2": 0.1 * jax.random.normal(ks[5], (out_channels,), jnp.float32),
        "g2": 1.0 + 0.1 * jax.random.normal(ks[6], (out_channels,), jnp.float32),
        "be2": 0.1 * jax.random.normal(ks[7], (out_channels,), jnp.float32),
    }
    if stride != 1 or in_channels != out_channels:
        p["wd"] = 0.1 * jax.random.normal(ks[8], (out_channels, in_channels, 1, 1), jnp.float32)
        p["bd"] = 0.1 * jax.random.normal(ks[9], (out_channels,), jnp.float32)
        p["gd"] = 1.0 + 0.1 * jax.random.normal(ks[10], (out_channels,), jnp.float32)
        p["bed"] = 0.1 * jax.random.normal(ks[11], (out_channels,), jnp.float32)
    return p


def basic_block_forward(x_nchw, params, stride):
    """Pallas implementation of BasicBlock.forward (training-mode BN).
    Input/output are NCHW for PyTorch parity."""
    has_downsample = "wd" in params                       # static (pytree structure)
    x = jnp.transpose(x_nchw, (0, 2, 3, 1)).astype(jnp.float32)   # NHWC, f32
    x_bf = x.astype(jnp.bfloat16)                         # bf16 BEFORE im2col
    n, h, w, cin = x.shape
    cout = params["w1"].shape[0]
    cout_pad = _round_up(cout, LANE)
    cin_pad = _round_up(cin, K_ALIGN)
    k1_pad = _round_up(9 * cin, K_ALIGN)
    k2_pad = _round_up(9 * cout, K_ALIGN)

    ho = (h + 2 - 3) // stride + 1
    wo = (w + 2 - 3) // stride + 1
    m = n * ho * wo

    # Tile size from the heaviest per-row VMEM footprint + per-gen VMEM budget.
    row_gemm1 = 2 * (k1_pad + cout_pad)
    row_gemm2 = 2 * (k2_pad + 2 * cout_pad) + (2 * cin_pad if has_downsample else 0)
    row_pass2 = (2 + 2 + 4 + 4) * cout_pad               # y/yd bf16 + res/out f32
    tm = _choose_tile_m(m, max(row_gemm1, row_gemm2, row_pass2), _vmem_limit_bytes())
    m_pad = _round_up(m, tm)

    # ---- conv1: im2col GEMM (bf16 MXU) + per-tile BN stats; fused BN1+ReLU ----
    patches1, _ = _im2col(x_bf, 3, stride, 1)
    p1 = _pad2d(patches1, m_pad, k1_pad)
    w1 = _oihw_to_gemm(params["w1"], k1_pad, cout_pad)
    # Conv bias omitted: training-mode BN subtracts the batch mean, so a
    # per-channel bias cancels exactly (and zero-padded rows stay out of the
    # stats).  Must be restored if inference/running-stats BN is ever used.
    y1, pstats1 = _conv_gemm_stats(p1, w1, tm)
    ss1 = _fold_bn(pstats1, params["g1"], params["be1"], float(m), cout_pad)
    out1 = _scale_shift_relu(y1, ss1, tm, jnp.bfloat16)   # bf16: only feeds conv2 GEMM

    # ---- conv2 (+ optional 1x1 downsample GEMM), BN, residual add, ReLU ----
    out1_nhwc = out1[:m, :cout].reshape(n, ho, wo, cout)
    patches2, _ = _im2col(out1_nhwc, 3, 1, 1)
    p2 = _pad2d(patches2, m_pad, k2_pad)
    w2 = _oihw_to_gemm(params["w2"], k2_pad, cout_pad)

    if has_downsample:
        res_in = _pad2d(x_bf[:, ::stride, ::stride, :].reshape(m, cin), m_pad, cin_pad)
        wd = _oihw_to_gemm(params["wd"], cin_pad, cout_pad)
        y2, yd, pstats2, pstatsd = _conv_gemm_stats_ds(p2, w2, res_in, wd, tm)
        ss2 = _fold_bn(pstats2, params["g2"], params["be2"], float(m), cout_pad)
        ssd = _fold_bn(pstatsd, params["gd"], params["bed"], float(m), cout_pad)
        out = _scale_shift2_add_relu(y2, ss2, yd, ssd, tm, jnp.float32)
    else:
        assert stride == 1 and cin == cout                # identity-residual invariant
        y2, pstats2 = _conv_gemm_stats(p2, w2, tm)
        ss2 = _fold_bn(pstats2, params["g2"], params["be2"], float(m), cout_pad)
        res = _pad2d(x.reshape(m, cout), m_pad, cout_pad)  # identity residual stays f32
        out = _scale_shift_add_relu(y2, ss2, res, tm, jnp.float32)

    out_nhwc = out[:m, :cout].reshape(n, ho, wo, cout)
    return jnp.transpose(out_nhwc, (0, 3, 1, 2))          # back to NCHW


# ---------------------- pure-JAX reference (for checking) -------------------

def reference_forward(x_nchw, params, stride):
    def conv(x, w, b, s, pad):
        y = lax.conv_general_dilated(
            x, w, (s, s), [(pad, pad), (pad, pad)],
            dimension_numbers=("NCHW", "OIHW", "NCHW"))
        return y + b.reshape(1, -1, 1, 1)

    def bn(x, g, be):
        mean = x.mean(axis=(0, 2, 3), keepdims=True)
        var = ((x - mean) ** 2).mean(axis=(0, 2, 3), keepdims=True)
        return ((x - mean) * lax.rsqrt(var + EPS)
                * g.reshape(1, -1, 1, 1) + be.reshape(1, -1, 1, 1))

    out = jax.nn.relu(bn(conv(x_nchw, params["w1"], params["b1"], stride, 1),
                         params["g1"], params["be1"]))
    out = bn(conv(out, params["w2"], params["b2"], 1, 1),
             params["g2"], params["be2"])
    if "wd" in params:
        res = bn(conv(x_nchw, params["wd"], params["bd"], stride, 0),
                 params["gd"], params["bed"])
    else:
        res = x_nchw
    return jax.nn.relu(out + res)


# --------------------------------- main --------------------------------------

if __name__ == "__main__":
    key = jax.random.PRNGKey(0)
    k_x, k_p, k_x2, k_p2 = jax.random.split(key, 4)

    fwd = jax.jit(basic_block_forward, static_argnums=(2,))
    # bf16 MXU operands AND bf16 storage of the conv outputs / out1 -> relaxed
    # tolerance vs. the pure-f32 reference (~bf16-mantissa-level error).
    TOL = 1e-1

    # Case 1: downsample path — BasicBlock(4, 8, stride=2), x: (2, 4, 16, 16)
    x = jax.random.normal(k_x, (2, 4, 16, 16), jnp.float32)
    params = init_params(k_p, 4, 8, 2)
    out = jax.block_until_ready(fwd(x, params, 2))
    ref = jax.block_until_ready(reference_forward(x, params, 2))
    assert out.shape == ref.shape == (2, 8, 8, 8)
    err = float(jnp.max(jnp.abs(out - ref)))
    assert err < TOL, err

    # Case 2: identity path — BasicBlock(8, 8, stride=1), x: (2, 8, 8, 8)
    x2 = jax.random.normal(k_x2, (2, 8, 8, 8), jnp.float32)
    params2 = init_params(k_p2, 8, 8, 1)
    out2 = jax.block_until_ready(fwd(x2, params2, 1))
    ref2 = jax.block_until_ready(reference_forward(x2, params2, 1))
    assert out2.shape == ref2.shape == (2, 8, 8, 8)
    err2 = float(jnp.max(jnp.abs(out2 - ref2)))
    assert err2 < TOL, err2

    print("KERNEL_OK")
</pallas_src>

<mosaic_0001>
module attributes {stable_mosaic.version = 11 : i64} {
  func.func @conv_gemm_stats_kernel(%arg0: i32, %arg1: memref<64x48xbf16, #tpu.memory_space<vmem>>, %arg2: memref<48x128xbf16, #tpu.memory_space<vmem>>, %arg3: memref<64x128xbf16, #tpu.memory_space<vmem>>, %arg4: memref<1x2x128xf32, #tpu.memory_space<vmem>>) attributes {dimension_semantics = [#tpu.dimension_semantics<parallel>], iteration_bounds = array<i64: 2>, scalar_prefetch = 0 : i64, scratch_operands = 0 : i64, tpu.core_type = #tpu.core_type<tc>, window_params = [{transform_indices = @transform_0, window_bounds = array<i64: 64, 48>}, {pipeline_mode = #tpu.pipeline_mode<synchronous>, transform_indices = @transform_1, window_bounds = array<i64: 48, 128>}, {transform_indices = @transform_2, window_bounds = array<i64: 64, 128>}, {transform_indices = @transform_3, window_bounds = array<i64: 1, 2, 128>}]} {
    %c0 = arith.constant 0 : index
    %c0_0 = arith.constant 0 : index
    %0 = vector.load %arg1[%c0, %c0_0] : memref<64x48xbf16, #tpu.memory_space<vmem>>, vector<64x48xbf16>
    %c0_1 = arith.constant 0 : index
    %c0_2 = arith.constant 0 : index
    %1 = vector.load %arg2[%c0_1, %c0_2] : memref<48x128xbf16, #tpu.memory_space<vmem>>, vector<48x128xbf16>
    %cst = arith.constant dense<0.000000e+00> : vector<64x128xf32>
    %2 = tpu.matmul %0, %1, %cst {dimension_numbers = #tpu.dot_dimension_numbers<[1], [0], [0], [1], [0, 0, 1, 1], [], []>} : vector<64x48xbf16>, vector<48x128xbf16>, vector<64x128xf32> -> vector<64x128xf32>
    %3 = arith.truncf %2 : vector<64x128xf32> to vector<64x128xbf16>
    %c0_3 = arith.constant 0 : index
    %c0_4 = arith.constant 0 : index
    %4 = vector.load %arg3[%c0_3, %c0_4] : memref<64x128xbf16, #tpu.memory_space<vmem>>, vector<64x128xbf16>
    tpu.vector_store %arg3[%c0_3, %c0_4], %3 {strides = array<i32>} : memref<64x128xbf16, #tpu.memory_space<vmem>>, vector<64x128xbf16>,
    %cst_5 = arith.constant dense<0.000000e+00> : vector<128xf32>
    %5 = vector.multi_reduction <add>, %2, %cst_5 [0] : vector<64x128xf32> to vector<128xf32>
    %6 = vector.shape_cast %5 : vector<128xf32> to vector<1x128xf32>
    %7 = arith.mulf %2, %2 : vector<64x128xf32>
    %cst_6 = arith.constant dense<0.000000e+00> : vector<128xf32>
    %8 = vector.multi_reduction <add>, %7, %cst_6 [0] : vector<64x128xf32> to vector<128xf32>
    %9 = vector.shape_cast %8 : vector<128xf32> to vector<1x128xf32>
    %10 = tpu.concatenate %6, %9 in 0 : vector<1x128xf32>, vector<1x128xf32> -> vector<2x128xf32>
    %11 = vector.shape_cast %10 : vector<2x128xf32> to vector<1x2x128xf32>
    %c0_7 = arith.constant 0 : index
    %c0_8 = arith.constant 0 : index
    %c0_9 = arith.constant 0 : index
    %12 = vector.load %arg4[%c0_7, %c0_8, %c0_9] : memref<1x2x128xf32, #tpu.memory_space<vmem>>, vector<1x2x128xf32>
    tpu.vector_store %arg4[%c0_7, %c0_8, %c0_9], %11 {strides = array<i32>} : memref<1x2x128xf32, #tpu.memory_space<vmem>>, vector<1x2x128xf32>,
    return
  }
  func.func @transform_0(%arg0: i32) -> (i32, i32) {
    %c0_i32 = arith.constant 0 : i32
    %c0_i32_0 = arith.constant 0 : i32
    return %arg0, %c0_i32 : i32, i32
  }
  func.func @transform_1(%arg0: i32) -> (i32, i32) {
    %c0_i32 = arith.constant 0 : i32
    %c0_i32_0 = arith.constant 0 : i32
    %c0_i32_1 = arith.constant 0 : i32
    return %c0_i32, %c0_i32_0 : i32, i32
  }
  func.func @transform_2(%arg0: i32) -> (i32, i32) {
    %c0_i32 = arith.constant 0 : i32
    %c0_i32_0 = arith.constant 0 : i32
    return %arg0, %c0_i32 : i32, i32
  }
  func.func @transform_3(%arg0: i32) -> (i32, i32, i32) {
    %c0_i32 = arith.constant 0 : i32
    %c0_i32_0 = arith.constant 0 : i32
    %c0_i32_1 = arith.constant 0 : i32
    return %arg0, %c0_i32, %c0_i32_0 : i32, i32, i32
  }
}

module attributes {stable_mosaic.version = 11 : i64} {
  func.func @scale_shift_relu_kernel(%arg0: i32, %arg1: memref<64x128xbf16, #tpu.memory_space<vmem>>, %arg2: memref<2x128xf32, #tpu.memory_space<vmem>>, %arg3: memref<64x128xbf16, #tpu.memory_space<vmem>>) attributes {dimension_semantics = [#tpu.dimension_semantics<parallel>], iteration_bounds = array<i64: 2>, scalar_prefetch = 0 : i64, scratch_operands = 0 : i64, tpu.core_type = #tpu.core_type<tc>, window_params = [{transform_indices = @transform_0, window_bounds = array<i64: 64, 128>}, {pipeline_mode = #tpu.pipeline_mode<synchronous>, transform_indices = @transform_1, window_bounds = array<i64: 2, 128>}, {transform_indices = @transform_2, window_bounds = array<i64: 64, 128>}]} {
    %c0 = arith.constant 0 : index
    %c0_0 = arith.constant 0 : index
    %0 = vector.load %arg1[%c0, %c0_0] : memref<64x128xbf16, #tpu.memory_space<vmem>>, vector<64x128xbf16>
    %1 = arith.extf %0 : vector<64x128xbf16> to vector<64x128xf32>
    %c0_1 = arith.constant 0 : index
    %c0_2 = arith.constant 0 : index
    %2 = vector.load %arg2[%c0_1, %c0_2] : memref<2x128xf32, #tpu.memory_space<vmem>>, vector<1x128xf32>
    %3 = vector.broadcast %2 : vector<1x128xf32> to vector<64x128xf32>
    %4 = arith.mulf %1, %3 : vector<64x128xf32>
    %c1 = arith.constant 1 : index
    %c0_3 = arith.constant 0 : index
    %5 = vector.load %arg2[%c1, %c0_3] : memref<2x128xf32, #tpu.memory_space<vmem>>, vector<1x128xf32>
    %6 = vector.broadcast %5 : vector<1x128xf32> to vector<64x128xf32>
    %7 = arith.addf %4, %6 : vector<64x128xf32>
    %cst = arith.constant 0.000000e+00 : f32
    %8 = vector.broadcast %cst : f32 to vector<64x128xf32>
    %9 = arith.maximumf %7, %8 : vector<64x128xf32>
    %10 = arith.truncf %9 : vector<64x128xf32> to vector<64x128xbf16>
    %c0_4 = arith.constant 0 : index
    %c0_5 = arith.constant 0 : index
    %11 = vector.load %arg3[%c0_4, %c0_5] : memref<64x128xbf16, #tpu.memory_space<vmem>>, vector<64x128xbf16>
    tpu.vector_store %arg3[%c0_4, %c0_5], %10 {strides = array<i32>} : memref<64x128xbf16, #tpu.memory_space<vmem>>, vector<64x128xbf16>,
    return
  }
  func.func @transform_0(%arg0: i32) -> (i32, i32) {
    %c0_i32 = arith.constant 0 : i32
    %c0_i32_0 = arith.constant 0 : i32
    return %arg0, %c0_i32 : i32, i32
  }
  func.func @transform_1(%arg0: i32) -> (i32, i32) {
    %c0_i32 = arith.constant 0 : i32
    %c0_i32_0 = arith.constant 0 : i32
    %c0_i32_1 = arith.constant 0 : i32
    return %c0_i32, %c0_i32_0 : i32, i32
  }
  func.func @transform_2(%arg0: i32) -> (i32, i32) {
    %c0_i32 = arith.constant 0 : i32
    %c0_i32_0 = arith.constant 0 : i32
    return %arg0, %c0_i32 : i32, i32
  }
}

module attributes {stable_mosaic.version = 11 : i64} {
  func.func @scale_shift2_add_relu_kernel(%arg0: i32, %arg1: memref<64x128xbf16, #tpu.memory_space<vmem>>, %arg2: memref<2x128xf32, #tpu.memory_space<vmem>>, %arg3: memref<64x128xbf16, #tpu.memory_space<vmem>>, %arg4: memref<2x128xf32, #tpu.memory_space<vmem>>, %arg5: memref<64x128xf32, #tpu.memory_space<vmem>>) attributes {dimension_semantics = [#tpu.dimension_semantics<parallel>], iteration_bounds = array<i64: 2>, scalar_prefetch = 0 : i64, scratch_operands = 0 : i64, tpu.core_type = #tpu.core_type<tc>, window_params = [{transform_indices = @transform_0, window_bounds = array<i64: 64, 128>}, {pipeline_mode = #tpu.pipeline_mode<synchronous>, transform_indices = @transform_1, window_bounds = array<i64: 2, 128>}, {transform_indices = @transform_2, window_bounds = array<i64: 64, 128>}, {pipeline_mode = #tpu.pipeline_mode<synchronous>, transform_indices = @transform_3, window_bounds = array<i64: 2, 128>}, {transform_indices = @transform_4, window_bounds = array<i64: 64, 128>}]} {
    %c0 = arith.constant 0 : index
    %c0_0 = arith.constant 0 : index
    %0 = vector.load %arg1[%c0, %c0_0] : memref<64x128xbf16, #tpu.memory_space<vmem>>, vector<64x128xbf16>
    %1 = arith.extf %0 : vector<64x128xbf16> to vector<64x128xf32>
    %c0_1 = arith.constant 0 : index
    %c0_2 = arith.constant 0 : index
    %2 = vector.load %arg2[%c0_1, %c0_2] : memref<2x128xf32, #tpu.memory_space<vmem>>, vector<1x128xf32>
    %3 = vector.broadcast %2 : vector<1x128xf32> to vector<64x128xf32>
    %4 = arith.mulf %1, %3 : vector<64x128xf32>
    %c1 = arith.constant 1 : index
    %c0_3 = arith.constant 0 : index
    %5 = vector.load %arg2[%c1, %c0_3] : memref<2x128xf32, #tpu.memory_space<vmem>>, vector<1x128xf32>
    %6 = vector.broadcast %5 : vector<1x128xf32> to vector<64x128xf32>
    %7 = arith.addf %4, %6 : vector<64x128xf32>
    %c0_4 = arith.constant 0 : index
    %c0_5 = arith.constant 0 : index
    %8 = vector.load %arg3[%c0_4, %c0_5] : memref<64x128xbf16, #tpu.memory_space<vmem>>, vector<64x128xbf16>
    %9 = arith.extf %8 : vector<64x128xbf16> to vector<64x128xf32>
    %c0_6 = arith.constant 0 : index
    %c0_7 = arith.constant 0 : index
    %10 = vector.load %arg4[%c0_6, %c0_7] : memref<2x128xf32, #tpu.memory_space<vmem>>, vector<1x128xf32>
    %11 = vector.broadcast %10 : vector<1x128xf32> to vector<64x128xf32>
    %12 = arith.mulf %9, %11 : vector<64x128xf32>
    %13 = arith.addf %7, %12 : vector<64x128xf32>
    %c1_8 = arith.constant 1 : index
    %c0_9 = arith.constant 0 : index
    %14 = vector.load %arg4[%c1_8, %c0_9] : memref<2x128xf32, #tpu.memory_space<vmem>>, vector<1x128xf32>
    %15 = vector.broadcast %14 : vector<1x128xf32> to vector<64x128xf32>
    %16 = arith.addf %13, %15 : vector<64x128xf32>
    %cst = arith.constant 0.000000e+00 : f32
    %17 = vector.broadcast %cst : f32 to vector<64x128xf32>
    %18 = arith.maximumf %16, %17 : vector<64x128xf32>
    %c0_10 = arith.constant 0 : index
    %c0_11 = arith.constant 0 : index
    %19 = vector.load %arg5[%c0_10, %c0_11] : memref<64x128xf32, #tpu.memory_space<vmem>>, vector<64x128xf32>
    tpu.vector_store %arg5[%c0_10, %c0_11], %18 {strides = array<i32>} : memref<64x128xf32, #tpu.memory_space<vmem>>, vector<64x128xf32>,
    return
  }
  func.func @transform_0(%arg0: i32) -> (i32, i32) {
    %c0_i32 = arith.constant 0 : i32
    %c0_i32_0 = arith.constant 0 : i32
    return %arg0, %c0_i32 : i32, i32
  }
  func.func @transform_1(%arg0: i32) -> (i32, i32) {
    %c0_i32 = arith.constant 0 : i32
    %c0_i32_0 = arith.constant 0 : i32
    %c0_i32_1 = arith.constant 0 : i32
    return %c0_i32, %c0_i32_0 : i32, i32
  }
  func.func @transform_2(%arg0: i32) -> (i32, i32) {
    %c0_i32 = arith.constant 0 : i32
    %c0_i32_0 = arith.constant 0 : i32
    return %arg0, %c0_i32 : i32, i32
  }
  func.func @transform_3(%arg0: i32) -> (i32, i32) {
    %c0_i32 = arith.constant 0 : i32
    %c0_i32_0 = arith.constant 0 : i32
    %c0_i32_1 = arith.constant 0 : i32
    return %c0_i32, %c0_i32_0 : i32, i32
  }
  func.func @transform_4(%arg0: i32) -> (i32, i32) {
    %c0_i32 = arith.constant 0 : i32
    %c0_i32_0 = arith.constant 0 : i32
    return %arg0, %c0_i32 : i32, i32
  }
}

module attributes {stable_mosaic.version = 11 : i64} {
  func.func @conv_gemm_stats_ds_kernel(%arg0: i32, %arg1: memref<64x80xbf16, #tpu.memory_space<vmem>>, %arg2: memref<80x128xbf16, #tpu.memory_space<vmem>>, %arg3: memref<64x16xbf16, #tpu.memory_space<vmem>>, %arg4: memref<16x128xbf16, #tpu.memory_space<vmem>>, %arg5: memref<64x128xbf16, #tpu.memory_space<vmem>>, %arg6: memref<64x128xbf16, #tpu.memory_space<vmem>>, %arg7: memref<1x2x128xf32, #tpu.memory_space<vmem>>, %arg8: memref<1x2x128xf32, #tpu.memory_space<vmem>>) attributes {dimension_semantics = [#tpu.dimension_semantics<parallel>], iteration_bounds = array<i64: 2>, scalar_prefetch = 0 : i64, scratch_operands = 0 : i64, tpu.core_type = #tpu.core_type<tc>, window_params = [{transform_indices = @transform_0, window_bounds = array<i64: 64, 80>}, {pipeline_mode = #tpu.pipeline_mode<synchronous>, transform_indices = @transform_1, window_bounds = array<i64: 80, 128>}, {transform_indices = @transform_2, window_bounds = array<i64: 64, 16>}, {pipeline_mode = #tpu.pipeline_mode<synchronous>, transform_indices = @transform_3, window_bounds = array<i64: 16, 128>}, {transform_indices = @transform_4, window_bounds = array<i64: 64, 128>}, {transform_indices = @transform_5, window_bounds = array<i64: 64, 128>}, {transform_indices = @transform_6, window_bounds = array<i64: 1, 2, 128>}, {transform_indices = @transform_7, window_bounds = array<i64: 1, 2, 128>}]} {
    %c0 = arith.constant 0 : index
    %c0_0 = arith.constant 0 : index
    %0 = vector.load %arg1[%c0, %c0_0] : memref<64x80xbf16, #tpu.memory_space<vmem>>, vector<64x80xbf16>
    %c0_1 = arith.constant 0 : index
    %c0_2 = arith.constant 0 : index
    %1 = vector.load %arg2[%c0_1, %c0_2] : memref<80x128xbf16, #tpu.memory_space<vmem>>, vector<80x128xbf16>
    %cst = arith.constant dense<0.000000e+00> : vector<64x128xf32>
    %2 = tpu.matmul %0, %1, %cst {dimension_numbers = #tpu.dot_dimension_numbers<[1], [0], [0], [1], [0, 0, 1, 1], [], []>} : vector<64x80xbf16>, vector<80x128xbf16>, vector<64x128xf32> -> vector<64x128xf32>
    %c0_3 = arith.constant 0 : index
    %c0_4 = arith.constant 0 : index
    %3 = vector.load %arg3[%c0_3, %c0_4] : memref<64x16xbf16, #tpu.memory_space<vmem>>, vector<64x16xbf16>
    %c0_5 = arith.constant 0 : index
    %c0_6 = arith.constant 0 : index
    %4 = vector.load %arg4[%c0_5, %c0_6] : memref<16x128xbf16, #tpu.memory_space<vmem>>, vector<16x128xbf16>
    %cst_7 = arith.constant dense<0.000000e+00> : vector<64x128xf32>
    %5 = tpu.matmul %3, %4, %cst_7 {dimension_numbers = #tpu.dot_dimension_numbers<[1], [0], [0], [1], [0, 0, 1, 1], [], []>} : vector<64x16xbf16>, vector<16x128xbf16>, vector<64x128xf32> -> vector<64x128xf32>
    %6 = arith.truncf %2 : vector<64x128xf32> to vector<64x128xbf16>
    %c0_8 = arith.constant 0 : index
    %c0_9 = arith.constant 0 : index
    %7 = vector.load %arg5[%c0_8, %c0_9] : memref<64x128xbf16, #tpu.memory_space<vmem>>, vector<64x128xbf16>
    tpu.vector_store %arg5[%c0_8, %c0_9], %6 {strides = array<i32>} : memref<64x128xbf16, #tpu.memory_space<vmem>>, vector<64x128xbf16>,
    %8 = arith.truncf %5 : vector<64x128xf32> to vector<64x128xbf16>
    %c0_10 = arith.constant 0 : index
    %c0_11 = arith.constant 0 : index
    %9 = vector.load %arg6[%c0_10, %c0_11] : memref<64x128xbf16, #tpu.memory_space<vmem>>, vector<64x128xbf16>
    tpu.vector_store %arg6[%c0_10, %c0_11], %8 {strides = array<i32>} : memref<64x128xbf16, #tpu.memory_space<vmem>>, vector<64x128xbf16>,
    %cst_12 = arith.constant dense<0.000000e+00> : vector<128xf32>
    %10 = vector.multi_reduction <add>, %2, %cst_12 [0] : vector<64x128xf32> to vector<128xf32>
    %11 = vector.shape_cast %10 : vector<128xf32> to vector<1x128xf32>
    %12 = arith.mulf %2, %2 : vector<64x128xf32>
    %cst_13 = arith.constant dense<0.000000e+00> : vector<128xf32>
    %13 = vector.multi_reduction <add>, %12, %cst_13 [0] : vector<64x128xf32> to vector<128xf32>
    %14 = vector.shape_cast %13 : vector<128xf32> to vector<1x128xf32>
    %15 = tpu.concatenate %11, %14 in 0 : vector<1x128xf32>, vector<1x128xf32> -> vector<2x128xf32>
    %cst_14 = arith.constant dense<0.000000e+00> : vector<128xf32>
    %16 = vector.multi_reduction <add>, %5, %cst_14 [0] : vector<64x128xf32> to vector<128xf32>
    %17 = vector.shape_cast %16 : vector<128xf32> to vector<1x128xf32>
    %18 = arith.mulf %5, %5 : vector<64x128xf32>
    %cst_15 = arith.constant dense<0.000000e+00> : vector<128xf32>
    %19 = vector.multi_reduction <add>, %18, %cst_15 [0] : vector<64x128xf32> to vector<128xf32>
    %20 = vector.shape_cast %19 : vector<128xf32> to vector<1x128xf32>
    %21 = tpu.concatenate %17, %20 in 0 : vector<1x128xf32>, vector<1x128xf32> -> vector<2x128xf32>
    %22 = vector.shape_cast %15 : vector<2x128xf32> to vector<1x2x128xf32>
    %c0_16 = arith.constant 0 : index
    %c0_17 = arith.constant 0 : index
    %c0_18 = arith.constant 0 : index
    %23 = vector.load %arg7[%c0_16, %c0_17, %c0_18] : memref<1x2x128xf32, #tpu.memory_space<vmem>>, vector<1x2x128xf32>
    tpu.vector_store %arg7[%c0_16, %c0_17, %c0_18], %22 {strides = array<i32>} : memref<1x2x128xf32, #tpu.memory_space<vmem>>, vector<1x2x128xf32>,
    %24 = vector.shape_cast %21 : vector<2x128xf32> to vector<1x2x128xf32>
    %c0_19 = arith.constant 0 : index
    %c0_20 = arith.constant 0 : index
    %c0_21 = arith.constant 0 : index
    %25 = vector.load %arg8[%c0_19, %c0_20, %c0_21] : memref<1x2x128xf32, #tpu.memory_space<vmem>>, vector<1x2x128xf32>
    tpu.vector_store %arg8[%c0_19, %c0_20, %c0_21], %24 {strides = array<i32>} : memref<1x2x128xf32, #tpu.memory_space<vmem>>, vector<1x2x128xf32>,
    return
  }
  func.func @transform_0(%arg0: i32) -> (i32, i32) {
    %c0_i32 = arith.constant 0 : i32
    %c0_i32_0 = arith.constant 0 : i32
    return %arg0, %c0_i32 : i32, i32
  }
  func.func @transform_1(%arg0: i32) -> (i32, i32) {
    %c0_i32 = arith.constant 0 : i32
    %c0_i32_0 = arith.constant 0 : i32
    %c0_i32_1 = arith.constant 0 : i32
    return %c0_i32, %c0_i32_0 : i32, i32
  }
  func.func @transform_2(%arg0: i32) -> (i32, i32) {
    %c0_i32 = arith.constant 0 : i32
    %c0_i32_0 = arith.constant 0 : i32
    return %arg0, %c0_i32 : i32, i32
  }
  func.func @transform_3(%arg0: i32) -> (i32, i32) {
    %c0_i32 = arith.constant 0 : i32
    %c0_i32_0 = arith.constant 0 : i32
    %c0_i32_1 = arith.constant 0 : i32
    return %c0_i32, %c0_i32_0 : i32, i32
  }
  func.func @transform_4(%arg0: i32) -> (i32, i32) {
    %c0_i32 = arith.constant 0 : i32
    %c0_i32_0 = arith.constant 0 : i32
    return %arg0, %c0_i32 : i32, i32
  }
  func.func @transform_5(%arg0: i32) -> (i32, i32) {
    %c0_i32 = arith.constant 0 : i32
    %c0_i32_0 = arith.constant 0 : i32
    return %arg0, %c0_i32 : i32, i32
  }
  func.func @transform_6(%arg0: i32) -> (i32, i32, i32) {
    %c0_i32 = arith.constant 0 : i32
    %c0_i32_0 = arith.constant 0 : i32
    %c0_i32_1 = arith.constant 0 : i32
    return %arg0, %c0_i32, %c0_i32_0 : i32, i32, i32
  }
  func.func @transform_7(%arg0: i32) -> (i32, i32, i32) {
    %c0_i32 = arith.constant 0 : i32
    %c0_i32_0 = arith.constant 0 : i32
    %c0_i32_1 = arith.constant 0 : i32
    return %arg0, %c0_i32, %c0_i32_0 : i32, i32, i32
  }
}

</mosaic_0001>

<llo_original>
// kernel: basic_block_forward.5
$region0: #{basic_block_forward.5}
  #allocation0 [shape = 'u32[]', space=smem, size = 0x4, offset = 0x4, fixed_abs, tag = 'smem constant byte address 0x4 - core index']
  #allocation1 [shape = 'u32[72,128]{1,0:T(1,128)}', space=vmem, size = 0x9000, scoped, tag = 'internal scratch']
  %s0 = inlined_call_operand.vmem [shape: bf16[128,128], index: 0, kind: input, shape index: {}]
  %s1 = inlined_call_operand.vmem [shape: f32[2,128], index: 1, kind: input, shape index: {}]
  %s2 = inlined_call_operand.vmem [shape: bf16[128,128], index: 2, kind: output, shape index: {}]
  %s3 = sld [smem:[#allocation0]]
  $region41: #{basic_block_forward.5} parent=0
    _
  %s5 = ssub.s32 1, %s3
  %s6 = scalar_select 0, %s5, %s3
  loop: start=0, step=1, limit=4
  $region2: #{basic_block_forward.5} parent=0 // loop_pre_header
    _
  $region3: #{basic_block_forward.5} parent=0 // loop_header
    %s8 = sphi 0, %s12
    %p9 = scmp.ge.s32.totalorder %s8, 4
    %s18 = sphi 0, %s20
    %s21 = sphi 0, %s18
    %s22 = sphi 0, %s21
    %s38 = sphi 0, %s22
    %s42 = sphi 0, %s42
    %s44 = sphi 0, %s42
    %s45 = sphi 0, %s44
    %s59 = sphi 0, %s45
    %s65 = sphi 0, %s67
    %s68 = sphi 0, %s65
    %s69 = sphi 0, %s68
    %s85 = sphi 0, %s69
  $region4: #{basic_block_forward.5} parent=0 // loop_header_branch
    %11 = sbr.rel (%p9) target = $region8
  $region5: #{basic_block_forward.5} parent=0 // loop_body
    %s13 = ssub.s32 %s8, 1
    %s14 = ssub.s32 %s8, 2
    %s15 = sadd.s32 %s8, 1
    %s16 = ssub.s32 %s8, %s15
    %p17 = scmp.eq.s32.totalorder %s16, 0
    %s19 = sadd.s32 %s18, 1
    %s20 = scalar_select %p17, %s18, %s19
    %p23 = pneg %p17
    %p24 = scmp.eq.s32.totalorder %s8, 1
    %p25 = por %p23, %p24
    %p26 = scmp.ne.s32.totalorder %s18, %s21
    %p27 = scmp.eq.s32.totalorder %s8, 0
    %p28 = por %p26, %p27
    %p29 = scmp.ne.s32.totalorder %s18, %s21
    %p30 = scmp.eq.s32.totalorder %s13, 1
    %p31 = por %p29, %p30
    %p32 = scmp.ne.s32.totalorder %s21, %s22
    %p33 = scmp.eq.s32.totalorder %s13, 0
    %p34 = por %p32, %p33
    %p35 = scmp.ne.s32.totalorder %s21, %s22
    %p36 = scmp.eq.s32.totalorder %s14, 1
    %p37 = por %p35, %p36
    %p39 = scmp.ne.s32.totalorder %s22, %s38
    %p40 = scmp.eq.s32.totalorder %s14, 0
    %p41 = por %p39, %p40
    %s43 = sadd.s32 %s42, 1
    %p46 = scmp.eq.s32.totalorder %s8, 1
    %p47 = scmp.ne.s32.totalorder %s42, %s44
    %p48 = scmp.eq.s32.totalorder %s8, 0
    %p49 = por %p47, %p48
    %p50 = scmp.ne.s32.totalorder %s42, %s44
    %p51 = scmp.eq.s32.totalorder %s13, 1
    %p52 = por %p50, %p51
    %p53 = scmp.ne.s32.totalorder %s44, %s45
    %p54 = scmp.eq.s32.totalorder %s13, 0
    %p55 = por %p53, %p54
    %p56 = scmp.ne.s32.totalorder %s44, %s45
    %p57 = scmp.eq.s32.totalorder %s14, 1
    %p58 = por %p56, %p57
    %p60 = scmp.ne.s32.totalorder %s45, %s59
    %p61 = scmp.eq.s32.totalorder %s14, 0
    %p62 = por %p60, %p61
    %s63 = ssub.s32 %s8, %s15
    %p64 = scmp.eq.s32.totalorder %s63, 0
    %s66 = sadd.s32 %s65, 1
    %s67 = scalar_select %p64, %s65, %s66
    %p70 = pneg %p64
    %p71 = scmp.eq.s32.totalorder %s8, 1
    %p72 = por %p70, %p71
    %p73 = scmp.ne.s32.totalorder %s65, %s68
    %p74 = scmp.eq.s32.totalorder %s8, 0
    %p75 = por %p73, %p74
    %p76 = scmp.ne.s32.totalorder %s65, %s68
    %p77 = scmp.eq.s32.totalorder %s13, 1
    %p78 = por %p76, %p77
    %p79 = scmp.ne.s32.totalorder %s68, %s69
    %p80 = scmp.eq.s32.totalorder %s13, 0
    %p81 = por %p79, %p80
    %p82 = scmp.ne.s32.totalorder %s68, %s69
    %p83 = scmp.eq.s32.totalorder %s14, 1
    %p84 = por %p82, %p83
    %p86 = scmp.ne.s32.totalorder %s69, %s85
    %p87 = scmp.eq.s32.totalorder %s14, 0
    %p88 = por %p86, %p87
    %p89 = scmp.le.s32.totalorder 1, %s8
    %p90 = scmp.lt.s32.totalorder %s8, 3
    %p91 = pnand %p89, %p90
    %p92 = pneg %p91
    // Predicated region
    $region9: #{basic_block_forward.5} parent=5 // pred_check
      _
    $region10: #{basic_block_forward.5} parent=5 // pred_check_branch
      %94 = sbr.rel (%p91) target = $region12
    $region11: #{basic_block_forward.5} parent=5 // pred_region
      %s95 = ssub.s32 %s8, 1
      // Predicated region
      $region13: #{basic_block_forward.5} parent=11 // pred_check
        %p96 = pneg %p55
      $region14: #{basic_block_forward.5} parent=11 // pred_check_branch
        %98 = sbr.rel (%p96) target = $region16
      $region15: #{basic_block_forward.5} parent=11 // pred_region
        _
      $region16: #{basic_block_forward.5} parent=11 // pred_fallthru
        _
    $region12: #{basic_block_forward.5} parent=5 // pred_fallthru
      _
    %p99 = scmp.lt.s32.totalorder %s8, 2
    // Predicated region
    $region17: #{basic_block_forward.5} parent=5 // pred_check
      %p100 = pneg %p99
    $region18: #{basic_block_forward.5} parent=5 // pred_check_branch
      %102 = sbr.rel (%p100) target = $region20
    $region19: #{basic_block_forward.5} parent=5 // pred_region
      // Predicated region
      $region21: #{basic_block_forward.5} parent=19 // pred_check
        %p103 = pneg %p28
      $region22: #{basic_block_forward.5} parent=19 // pred_check_branch
        %105 = sbr.rel (%p103) target = $region24
      $region23: #{basic_block_forward.5} parent=19 // pred_region
        %s106 = smul.u32 8, %s8
        %p107 = scmp.lt.s32.totalorder %s106, 15
        %s108 = scalar_select %p107, %s106, 15
        %s109 = smul.addr %s108, 4
        %s110 = scalar_lea.vmem %s0, %s109
        %s111 = smul.u32 8, %s8
      $region24: #{basic_block_forward.5} parent=19 // pred_fallthru
        _
    $region20: #{basic_block_forward.5} parent=5 // pred_fallthru
      _
    %p112 = scmp.le.s32.totalorder 1, %s8
    %p113 = scmp.lt.s32.totalorder %s8, 3
    %p114 = pnand %p112, %p113
    %p115 = pneg %p114
    // Predicated region
    $region25: #{basic_block_forward.5} parent=5 // pred_check
      _
    $region26: #{basic_block_forward.5} parent=5 // pred_check_branch
      %117 = sbr.rel (%p114) target = $region28
    $region27: #{basic_block_forward.5} parent=5 // pred_region
      %s118 = ssub.s32 %s8, 1
      %s119 = smul.u32 8, %s13
      %p120 = scmp.lt.s32.totalorder %s119, 15
      %s121 = scalar_select %p120, %s119, 15
      %s122 = smul.addr %s121, 4
      %s123 = scalar_lea.vmem %s0, %s122
      %p124 = pneg %p34
      %p125 = pneg %p31
      %p126 = pneg %p55
      %p127 = pneg %p52
      %p128 = pneg %p81
      %p129 = pneg %p78
      %s130 = smul.u32 8, %s13
      %p131 = scmp.lt.s32.totalorder %s130, 15
      %s132 = scalar_select %p131, %s130, 15
      %s133 = smul.addr %s132, 4
      %s134 = scalar_lea.vmem %s2, %s133
      %s135 = smul.u32 8, %s13
      %p136 = scmp.lt.s32.totalorder %s135, 15
      %s137 = scalar_select %p136, %s135, 15
      %s138 = smul.addr %s137, 4
      %s139 = scalar_lea.vmem %s0, %s138
      %s140 = smul.u32 8, %s13
      %s141 = smul.u32 8, %s13
      %p142 = scmp.lt.s32.totalorder %s141, 15
      %s143 = scalar_select %p142, %s141, 15
      %s144 = smul.addr %s143, 4
      %s145 = scalar_lea.vmem %s2, %s144
      %s146 = smul.u32 8, %s13
      %v147 = vld [vmem:[%s139] sm:$0xf]
      %v148 = vld [vmem:[%s139 + $0x4] sm:$0xf]
      %v149 = vld [vmem:[%s139 + $0x8] sm:$0xf]
      %v150 = vld [vmem:[%s139 + $0xc] sm:$0xf]
      %v151 = vld [vmem:[%s139 + $0x10] sm:$0xf]
      %v152 = vld [vmem:[%s139 + $0x14] sm:$0xf]
      %v153 = vld [vmem:[%s139 + $0x18] sm:$0xf]
      %v154 = vld [vmem:[%s139 + $0x1c] sm:$0xf]
      %v155 = vunpack.c.l.bf16 %v147
      %v156 = vunpack.c.l.bf16 %v148
      %v157 = vunpack.c.l.bf16 %v149
      %v158 = vunpack.c.l.bf16 %v150
      %v159 = vunpack.c.l.bf16 %v151
      %v160 = vunpack.c.l.bf16 %v152
      %v161 = vunpack.c.l.bf16 %v153
      %v162 = vunpack.c.l.bf16 %v154
      %v163 = vld [vmem:[%s1] sm:$0x1]
      %v164 = vperm.slane %v163, 0
      %v165 = vmul.f32 %v155, %v164
      %v166 = vmul.f32 %v156, %v164
      %v167 = vmul.f32 %v157, %v164
      %v168 = vmul.f32 %v158, %v164
      %v169 = vmul.f32 %v159, %v164
      %v170 = vmul.f32 %v160, %v164
      %v171 = vmul.f32 %v161, %v164
      %v172 = vmul.f32 %v162, %v164
      %v173 = vld [vmem:[%s1 + $0x1] sm:$0x1]
      %v174 = vperm.slane %v173, 0
      %v175 = vadd.f32 %v165, %v174
      %v176 = vadd.f32 %v166, %v174
      %v177 = vadd.f32 %v167, %v174
      %v178 = vadd.f32 %v168, %v174
      %v179 = vadd.f32 %v169, %v174
      %v180 = vadd.f32 %v170, %v174
      %v181 = vadd.f32 %v171, %v174
      %v182 = vadd.f32 %v172, %v174
      %v183 = vmax.f32 %v175, 0.0
      %v184 = vmax.f32 %v176, 0.0
      %v185 = vmax.f32 %v177, 0.0
      %v186 = vmax.f32 %v178, 0.0
      %v187 = vmax.f32 %v179, 0.0
      %v188 = vmax.f32 %v180, 0.0
      %v189 = vmax.f32 %v181, 0.0
      %v190 = vmax.f32 %v182, 0.0
      %v191 = vpack.c.bf16 %v183, %v183
      %v192 = vpack.c.bf16 %v184, %v184
      %v193 = vpack.c.bf16 %v185, %v185
      %v194 = vpack.c.bf16 %v186, %v186
      %v195 = vpack.c.bf16 %v187, %v187
      %v196 = vpack.c.bf16 %v188, %v188
      %v197 = vpack.c.bf16 %v189, %v189
      %v198 = vpack.c.bf16 %v190, %v190
      %199 = vst [vmem:[%s145] sm:$0xf] %v191
      %200 = vst [vmem:[%s145 + $0x4] sm:$0xf] %v192
      %201 = vst [vmem:[%s145 + $0x8] sm:$0xf] %v193
      %202 = vst [vmem:[%s145 + $0xc] sm:$0xf] %v194
      %203 = vst [vmem:[%s145 + $0x10] sm:$0xf] %v195
      %204 = vst [vmem:[%s145 + $0x14] sm:$0xf] %v196
      %205 = vst [vmem:[%s145 + $0x18] sm:$0xf] %v197
      %206 = vst [vmem:[%s145 + $0x1c] sm:$0xf] %v198
      %s207 = smul.u32 8, %s13
      %p208 = scmp.lt.s32.totalorder %s207, 15
      %s209 = scalar_select %p208, %s207, 15
      %s210 = smul.addr %s209, 4
      %s211 = scalar_lea.vmem %s2, %s210
      // Predicated region
      $region29: #{basic_block_forward.5} parent=27 // pred_check
        %p212 = pneg %p78
      $region30: #{basic_block_forward.5} parent=27 // pred_check_branch
        %214 = sbr.rel (%p212) target = $region32
      $region31: #{basic_block_forward.5} parent=27 // pred_region
        %s215 = smul.u32 8, %s13
      $region32: #{basic_block_forward.5} parent=27 // pred_fallthru
        _
    $region28: #{basic_block_forward.5} parent=5 // pred_fallthru
      _
    %p216 = scmp.le.s32.totalorder 2, %s8
    // Predicated region
    $region33: #{basic_block_forward.5} parent=5 // pred_check
      %p217 = pneg %p216
    $region34: #{basic_block_forward.5} parent=5 // pred_check_branch
      %219 = sbr.rel (%p217) target = $region36
    $region35: #{basic_block_forward.5} parent=5 // pred_region
      %s220 = ssub.s32 %s8, 2
      // Predicated region
      $region37: #{basic_block_forward.5} parent=35 // pred_check
        %p221 = pneg %p84
      $region38: #{basic_block_forward.5} parent=35 // pred_check_branch
        %223 = sbr.rel (%p221) target = $region40
      $region39: #{basic_block_forward.5} parent=35 // pred_region
        %s224 = smul.u32 8, %s14
        %p225 = scmp.lt.s32.totalorder %s224, 15
        %s226 = scalar_select %p225, %s224, 15
        %s227 = smul.addr %s226, 4
        %s228 = scalar_lea.vmem %s2, %s227
      $region40: #{basic_block_forward.5} parent=35 // pred_fallthru
        _
    $region36: #{basic_block_forward.5} parent=5 // pred_fallthru
      _
  $region6: #{basic_block_forward.5} parent=0 // loop_footer
    %s12 = sadd.s32 1, %s8
  $region7: #{basic_block_forward.5} parent=0 // loop_footer_branch
    %7 = sbr.rel target = $region3
  $region8: #{basic_block_forward.5} parent=0 // loop_exit
    _

// kernel: basic_block_forward.4
$region0: #{basic_block_forward.4}
  #allocation0 [shape = 'u32[]', space=smem, size = 0x4, offset = 0x4, fixed_abs, tag = 'smem constant byte address 0x4 - core index']
  #allocation1 [shape = 'u32[72,128]{1,0:T(1,128)}', space=vmem, size = 0x9000, scoped, tag = 'internal scratch']
  %s0 = inlined_call_operand.vmem [shape: bf16[128,48], index: 0, kind: input, shape index: {}]
  %s1 = inlined_call_operand.vmem [shape: bf16[48,128], index: 1, kind: input, shape index: {}]
  %s2 = inlined_call_operand.vmem [shape: bf16[128,128], index: 2, kind: output, shape index: {0}]
  %s3 = inlined_call_operand.vmem [shape: f32[2,2,128], index: 3, kind: output, shape index: {1}]
  %4 = xla_tuple %s2, %s3
  %s5 = sld [smem:[#allocation0]]
  $region49: #{basic_block_forward.4} parent=0
    _
  %s7 = ssub.s32 1, %s5
  %s8 = scalar_select 0, %s7, %s5
  loop: start=0, step=1, limit=4
  $region2: #{basic_block_forward.4} parent=0 // loop_pre_header
    _
  $region3: #{basic_block_forward.4} parent=0 // loop_header
    %s10 = sphi 0, %s14
    %p11 = scmp.ge.s32.totalorder %s10, 4
    %s20 = sphi 0, %s22
    %s23 = sphi 0, %s20
    %s24 = sphi 0, %s23
    %s40 = sphi 0, %s24
    %s44 = sphi 0, %s44
    %s46 = sphi 0, %s44
    %s47 = sphi 0, %s46
    %s61 = sphi 0, %s47
    %s67 = sphi 0, %s69
    %s70 = sphi 0, %s67
    %s71 = sphi 0, %s70
    %s87 = sphi 0, %s71
    %s93 = sphi 0, %s95
    %s96 = sphi 0, %s93
    %s97 = sphi 0, %s96
    %s113 = sphi 0, %s97
  $region4: #{basic_block_forward.4} parent=0 // loop_header_branch
    %13 = sbr.rel (%p11) target = $region8
  $region5: #{basic_block_forward.4} parent=0 // loop_body
    %s15 = ssub.s32 %s10, 1
    %s16 = ssub.s32 %s10, 2
    %s17 = sadd.s32 %s10, 1
    %s18 = ssub.s32 %s10, %s17
    %p19 = scmp.eq.s32.totalorder %s18, 0
    %s21 = sadd.s32 %s20, 1
    %s22 = scalar_select %p19, %s20, %s21
    %p25 = pneg %p19
    %p26 = scmp.eq.s32.totalorder %s10, 1
    %p27 = por %p25, %p26
    %p28 = scmp.ne.s32.totalorder %s20, %s23
    %p29 = scmp.eq.s32.totalorder %s10, 0
    %p30 = por %p28, %p29
    %p31 = scmp.ne.s32.totalorder %s20, %s23
    %p32 = scmp.eq.s32.totalorder %s15, 1
    %p33 = por %p31, %p32
    %p34 = scmp.ne.s32.totalorder %s23, %s24
    %p35 = scmp.eq.s32.totalorder %s15, 0
    %p36 = por %p34, %p35
    %p37 = scmp.ne.s32.totalorder %s23, %s24
    %p38 = scmp.eq.s32.totalorder %s16, 1
    %p39 = por %p37, %p38
    %p41 = scmp.ne.s32.totalorder %s24, %s40
    %p42 = scmp.eq.s32.totalorder %s16, 0
    %p43 = por %p41, %p42
    %s45 = sadd.s32 %s44, 1
    %p48 = scmp.eq.s32.totalorder %s10, 1
    %p49 = scmp.ne.s32.totalorder %s44, %s46
    %p50 = scmp.eq.s32.totalorder %s10, 0
    %p51 = por %p49, %p50
    %p52 = scmp.ne.s32.totalorder %s44, %s46
    %p53 = scmp.eq.s32.totalorder %s15, 1
    %p54 = por %p52, %p53
    %p55 = scmp.ne.s32.totalorder %s46, %s47
    %p56 = scmp.eq.s32.totalorder %s15, 0
    %p57 = por %p55, %p56
    %p58 = scmp.ne.s32.totalorder %s46, %s47
    %p59 = scmp.eq.s32.totalorder %s16, 1
    %p60 = por %p58, %p59
    %p62 = scmp.ne.s32.totalorder %s47, %s61
    %p63 = scmp.eq.s32.totalorder %s16, 0
    %p64 = por %p62, %p63
    %s65 = ssub.s32 %s10, %s17
    %p66 = scmp.eq.s32.totalorder %s65, 0
    %s68 = sadd.s32 %s67, 1
    %s69 = scalar_select %p66, %s67, %s68
    %p72 = pneg %p66
    %p73 = scmp.eq.s32.totalorder %s10, 1
    %p74 = por %p72, %p73
    %p75 = scmp.ne.s32.totalorder %s67, %s70
    %p76 = scmp.eq.s32.totalorder %s10, 0
    %p77 = por %p75, %p76
    %p78 = scmp.ne.s32.totalorder %s67, %s70
    %p79 = scmp.eq.s32.totalorder %s15, 1
    %p80 = por %p78, %p79
    %p81 = scmp.ne.s32.totalorder %s70, %s71
    %p82 = scmp.eq.s32.totalorder %s15, 0
    %p83 = por %p81, %p82
    %p84 = scmp.ne.s32.totalorder %s70, %s71
    %p85 = scmp.eq.s32.totalorder %s16, 1
    %p86 = por %p84, %p85
    %p88 = scmp.ne.s32.totalorder %s71, %s87
    %p89 = scmp.eq.s32.totalorder %s16, 0
    %p90 = por %p88, %p89
    %s91 = ssub.s32 %s10, %s17
    %p92 = scmp.eq.s32.totalorder %s91, 0
    %s94 = sadd.s32 %s93, 1
    %s95 = scalar_select %p92, %s93, %s94
    %p98 = pneg %p92
    %p99 = scmp.eq.s32.totalorder %s10, 1
    %p100 = por %p98, %p99
    %p101 = scmp.ne.s32.totalorder %s93, %s96
    %p102 = scmp.eq.s32.totalorder %s10, 0
    %p103 = por %p101, %p102
    %p104 = scmp.ne.s32.totalorder %s93, %s96
    %p105 = scmp.eq.s32.totalorder %s15, 1
    %p106 = por %p104, %p105
    %p107 = scmp.ne.s32.totalorder %s96, %s97
    %p108 = scmp.eq.s32.totalorder %s15, 0
    %p109 = por %p107, %p108
    %p110 = scmp.ne.s32.totalorder %s96, %s97
    %p111 = scmp.eq.s32.totalorder %s16, 1
    %p112 = por %p110, %p111
    %p114 = scmp.ne.s32.totalorder %s97, %s113
    %p115 = scmp.eq.s32.totalorder %s16, 0
    %p116 = por %p114, %p115
    %p117 = scmp.le.s32.totalorder 1, %s10
    %p118 = scmp.lt.s32.totalorder %s10, 3
    %p119 = pnand %p117, %p118
    %p120 = pneg %p119
    // Predicated region
    $region9: #{basic_block_forward.4} parent=5 // pred_check
      _
    $region10: #{basic_block_forward.4} parent=5 // pred_check_branch
      %122 = sbr.rel (%p119) target = $region12
    $region11: #{basic_block_forward.4} parent=5 // pred_region
      %s123 = ssub.s32 %s10, 1
      // Predicated region
      $region13: #{basic_block_forward.4} parent=11 // pred_check
        %p124 = pneg %p57
      $region14: #{basic_block_forward.4} parent=11 // pred_check_branch
        %126 = sbr.rel (%p124) target = $region16
      $region15: #{basic_block_forward.4} parent=11 // pred_region
        _
      $region16: #{basic_block_forward.4} parent=11 // pred_fallthru
        _
    $region12: #{basic_block_forward.4} parent=5 // pred_fallthru
      _
    %p127 = scmp.lt.s32.totalorder %s10, 2
    // Predicated region
    $region17: #{basic_block_forward.4} parent=5 // pred_check
      %p128 = pneg %p127
    $region18: #{basic_block_forward.4} parent=5 // pred_check_branch
      %130 = sbr.rel (%p128) target = $region20
    $region19: #{basic_block_forward.4} parent=5 // pred_region
      // Predicated region
      $region21: #{basic_block_forward.4} parent=19 // pred_check
        %p131 = pneg %p30
      $region22: #{basic_block_forward.4} parent=19 // pred_check_branch
        %133 = sbr.rel (%p131) target = $region24
      $region23: #{basic_block_forward.4} parent=19 // pred_region
        %s134 = smul.u32 8, %s10
        %p135 = scmp.lt.s32.totalorder %s134, 15
        %s136 = scalar_select %p135, %s134, 15
        %s137 = smul.addr %s136, 4
        %s138 = scalar_lea.vmem %s0, %s137
        %s139 = smul.u32 8, %s10
      $region24: #{basic_block_forward.4} parent=19 // pred_fallthru
        _
    $region20: #{basic_block_forward.4} parent=5 // pred_fallthru
      _
    %p140 = scmp.le.s32.totalorder 1, %s10
    %p141 = scmp.lt.s32.totalorder %s10, 3
    %p142 = pnand %p140, %p141
    %p143 = pneg %p142
    // Predicated region
    $region25: #{basic_block_forward.4} parent=5 // pred_check
      _
    $region26: #{basic_block_forward.4} parent=5 // pred_check_branch
      %145 = sbr.rel (%p142) target = $region28
    $region27: #{basic_block_forward.4} parent=5 // pred_region
      %s146 = ssub.s32 %s10, 1
      %s147 = smul.u32 8, %s15
      %p148 = scmp.lt.s32.totalorder %s147, 15
      %s149 = scalar_select %p148, %s147, 15
      %s150 = smul.addr %s149, 4
      %s151 = scalar_lea.vmem %s0, %s150
      %p152 = pneg %p36
      %p153 = pneg %p33
      %p154 = pneg %p57
      %p155 = pneg %p54
      %p156 = pneg %p83
      %p157 = pneg %p80
      %s158 = smul.u32 8, %s15
      %p159 = scmp.lt.s32.totalorder %s158, 15
      %s160 = scalar_select %p159, %s158, 15
      %s161 = smul.addr %s160, 4
      %s162 = scalar_lea.vmem %s2, %s161
      %p163 = pneg %p109
      %p164 = pneg %p106
      %p165 = scmp.lt.s32.totalorder %s15, 1
      %s166 = scalar_select %p165, %s15, 1
      %s167 = smul.addr %s166, 2
      %s168 = scalar_lea.vmem %s3, %s167
      %s169 = smul.u32 8, %s15
      %p170 = scmp.lt.s32.totalorder %s169, 15
      %s171 = scalar_select %p170, %s169, 15
      %s172 = smul.addr %s171, 4
      %s173 = scalar_lea.vmem %s0, %s172
      %s174 = smul.u32 8, %s15
      %s175 = smul.u32 8, %s15
      %p176 = scmp.lt.s32.totalorder %s175, 15
      %s177 = scalar_select %p176, %s175, 15
      %s178 = smul.addr %s177, 4
      %s179 = scalar_lea.vmem %s2, %s178
      %s180 = smul.u32 8, %s15
      %p181 = scmp.lt.s32.totalorder %s15, 1
      %s182 = scalar_select %p181, %s15, 1
      %s183 = smul.addr %s182, 2
      %s184 = scalar_lea.vmem %s3, %s183
      %v186 = vld [vmem:[%s173] sm:$0xf]
      %v187 = vld [vmem:[%s173 + $0x4] sm:$0xf]
      %v188 = vld [vmem:[%s173 + $0x8] sm:$0xf]
      %v189 = vld [vmem:[%s173 + $0xc] sm:$0xf]
      %v190 = vld [vmem:[%s173 + $0x10] sm:$0xf]
      %v191 = vld [vmem:[%s173 + $0x14] sm:$0xf]
      %v192 = vld [vmem:[%s173 + $0x18] sm:$0xf]
      %v193 = vld [vmem:[%s173 + $0x1c] sm:$0xf]
      %v194 = vld [vmem:[%s1] sm:$0xf]
      %v195 = vld [vmem:[%s1 + $0x4] sm:$0xf]
      %v196 = vld [vmem:[%s1 + $0x8] sm:$0xf]
      %v197 = vld [vmem:[%s1 + $0xc] sm:$0xf]
      %v198 = vld [vmem:[%s1 + $0x10] sm:$0xf]
      %v199 = vld [vmem:[%s1 + $0x14] sm:$0xf]
      %v208 = vunpack.c.l.b16 %v186
      %v209 = vunpack.c.l.b16 %v187
      %v210 = vunpack.c.l.b16 %v188
      %v211 = vunpack.c.l.b16 %v189
      %v212 = vunpack.c.l.b16 %v190
      %v213 = vunpack.c.l.b16 %v191
      %v214 = vunpack.c.l.b16 %v192
      %v215 = vunpack.c.l.b16 %v193
      %v216 = vpack.c.b16 %v209, %v208
      %v217 = vpack.c.b16 %v211, %v210
      %v218 = vpack.c.b16 %v213, %v212
      %v219 = vpack.c.b16 %v215, %v214
      %v226 = vunpack.c.l.b16 %v194
      %v227 = vunpack.c.l.b16 %v195
      %v228 = vunpack.c.l.b16 %v196
      %v229 = vunpack.c.l.b16 %v197
      %v230 = vunpack.c.l.b16 %v198
      %v231 = vunpack.c.l.b16 %v199
      %v232 = vpack.c.b16 %v227, %v226
      %v233 = vpack.c.b16 %v229, %v228
      %v234 = vpack.c.b16 %v231, %v230
      %vm238 = vcmask 392192
      %v240 = vsel %vm238, %v216, 0
      %v243 = vsel %vm238, %v217, 0
      %v246 = vsel %vm238, %v218, 0
      %v249 = vsel %vm238, %v219, 0
      %251 = vmatpush.bf16.msra.mxu0 0
      %252 = vmatpush.bf16.msra.mxu0 0
      %253 = vmatpush.bf16.msra.mxu0 0
      %254 = vmatpush.bf16.msra.mxu0 0
      %255 = vmatpush.bf16.msra.mxu0 0
      %256 = vmatpush.bf16.msra.mxu0 %v234
      %257 = vmatpush.bf16.msra.mxu0 %v233
      %258 = vmatpush.bf16.msra.mxu0 %v232
      %259 = vmatmul.bf16.gmra.mxu0 %v240
      %v260 = vpop.f32.mrf.mxu0
      %v261 = vadd.f32 0.0, %v260
      %v262 = vpop.f32.mrf.mxu0
      %v263 = vadd.f32 0.0, %v262
      %264 = vmatmul.bf16.gmra.mxu0 %v243
      %v265 = vpop.f32.mrf.mxu0
      %v266 = vadd.f32 0.0, %v265
      %v267 = vpop.f32.mrf.mxu0
      %v268 = vadd.f32 0.0, %v267
      %269 = vmatmul.bf16.gmra.mxu0 %v246
      %v270 = vpop.f32.mrf.mxu0
      %v271 = vadd.f32 0.0, %v270
      %v272 = vpop.f32.mrf.mxu0
      %v273 = vadd.f32 0.0, %v272
      %274 = vmatmul.bf16.gmra.mxu0 %v249
      %v275 = vpop.f32.mrf.mxu0
      %v276 = vadd.f32 0.0, %v275
      %v277 = vpop.f32.mrf.mxu0
      %v278 = vadd.f32 0.0, %v277
      %279 = vdwg.mxu0
      %v280 = vpack.c.bf16 %v261, %v261
      %v281 = vpack.c.bf16 %v263, %v263
      %v282 = vpack.c.bf16 %v266, %v266
      %v283 = vpack.c.bf16 %v268, %v268
      %v284 = vpack.c.bf16 %v271, %v271
      %v285 = vpack.c.bf16 %v273, %v273
      %v286 = vpack.c.bf16 %v276, %v276
      %v287 = vpack.c.bf16 %v278, %v278
      %288 = vst [vmem:[%s179] sm:$0xf] %v280
      %289 = vst [vmem:[%s179 + $0x4] sm:$0xf] %v281
      %290 = vst [vmem:[%s179 + $0x8] sm:$0xf] %v282
      %291 = vst [vmem:[%s179 + $0xc] sm:$0xf] %v283
      %292 = vst [vmem:[%s179 + $0x10] sm:$0xf] %v284
      %293 = vst [vmem:[%s179 + $0x14] sm:$0xf] %v285
      %294 = vst [vmem:[%s179 + $0x18] sm:$0xf] %v286
      %295 = vst [vmem:[%s179 + $0x1c] sm:$0xf] %v287
      %v296 = vadd.f32 %v261, %v263
      %v297 = vadd.f32 %v296, %v266
      %v298 = vadd.f32 %v297, %v268
      %v299 = vadd.f32 %v298, %v271
      %v300 = vadd.f32 %v299, %v273
      %v301 = vadd.f32 %v300, %v276
      %v302 = vadd.f32 %v301, %v278
      %v303 = vrot.slane %v302, 4
      %v304 = vadd.f32 %v302, %v303
      %v305 = vrot.slane %v304, 2
      %v306 = vadd.f32 %v304, %v305
      %v307 = vrot.slane %v306, 1
      %v308 = vadd.f32 %v306, %v307
      %v309 = vmul.f32 %v261, %v261
      %v310 = vmul.f32 %v263, %v263
      %v311 = vmul.f32 %v266, %v266
      %v312 = vmul.f32 %v268, %v268
      %v313 = vmul.f32 %v271, %v271
      %v314 = vmul.f32 %v273, %v273
      %v315 = vmul.f32 %v276, %v276
      %v316 = vmul.f32 %v278, %v278
      %v317 = vadd.f32 %v309, %v310
      %v318 = vadd.f32 %v317, %v311
      %v319 = vadd.f32 %v318, %v312
      %v320 = vadd.f32 %v319, %v313
      %v321 = vadd.f32 %v320, %v314
      %v322 = vadd.f32 %v321, %v315
      %v323 = vadd.f32 %v322, %v316
      %v324 = vrot.slane %v323, 4
      %v325 = vadd.f32 %v323, %v324
      %v326 = vrot.slane %v325, 2
      %v327 = vadd.f32 %v325, %v326
      %v328 = vrot.slane %v327, 1
      %v329 = vadd.f32 %v327, %v328
      %vm330 = vcmask 1040384
      %v331 = vsel %vm330, %v308, %v329
      %332 = vst [vmem:[%s184] sm:$0x3] %v331
      %s333 = smul.u32 8, %s15
      %p334 = scmp.lt.s32.totalorder %s333, 15
      %s335 = scalar_select %p334, %s333, 15
      %s336 = smul.addr %s335, 4
      %s337 = scalar_lea.vmem %s2, %s336
      %p338 = scmp.lt.s32.totalorder %s15, 1
      %s339 = scalar_select %p338, %s15, 1
      %s340 = smul.addr %s339, 2
      %s341 = scalar_lea.vmem %s3, %s340
      // Predicated region
      $region29: #{basic_block_forward.4} parent=27 // pred_check
        %p342 = pneg %p80
      $region30: #{basic_block_forward.4} parent=27 // pred_check_branch
        %344 = sbr.rel (%p342) target = $region32
      $region31: #{basic_block_forward.4} parent=27 // pred_region
        %s345 = smul.u32 8, %s15
      $region32: #{basic_block_forward.4} parent=27 // pred_fallthru
        _
      // Predicated region
      $region33: #{basic_block_forward.4} parent=27 // pred_check
        %p346 = pneg %p106
      $region34: #{basic_block_forward.4} parent=27 // pred_check_branch
        %348 = sbr.rel (%p346) target = $region36
      $region35: #{basic_block_forward.4} parent=27 // pred_region
        _
      $region36: #{basic_block_forward.4} parent=27 // pred_fallthru
        _
    $region28: #{basic_block_forward.4} parent=5 // pred_fallthru
      _
    %p349 = scmp.le.s32.totalorder 2, %s10
    // Predicated region
    $region37: #{basic_block_forward.4} parent=5 // pred_check
      %p350 = pneg %p349
    $region38: #{basic_block_forward.4} parent=5 // pred_check_branch
      %352 = sbr.rel (%p350) target = $region40
    $region39: #{basic_block_forward.4} parent=5 // pred_region
      %s353 = ssub.s32 %s10, 2
      // Predicated region
      $region41: #{basic_block_forward.4} parent=39 // pred_check
        %p354 = pneg %p86
      $region42: #{basic_block_forward.4} parent=39 // pred_check_branch
        %356 = sbr.rel (%p354) target = $region44
      $region43: #{basic_block_forward.4} parent=39 // pred_region
        %s357 = smul.u32 8, %s16
        %p358 = scmp.lt.s32.totalorder %s357, 15
        %s359 = scalar_select %p358, %s357, 15
        %s360 = smul.addr %s359, 4
        %s361 = scalar_lea.vmem %s2, %s360
      $region44: #{basic_block_forward.4} parent=39 // pred_fallthru
        _
      // Predicated region
      $region45: #{basic_block_forward.4} parent=39 // pred_check
        %p362 = pneg %p112
      $region46: #{basic_block_forward.4} parent=39 // pred_check_branch
        %364 = sbr.rel (%p362) target = $region48
      $region47: #{basic_block_forward.4} parent=39 // pred_region
        %p365 = scmp.lt.s32.totalorder %s16, 1
        %s366 = scalar_select %p365, %s16, 1
        %s367 = smul.addr %s366, 2
        %s368 = scalar_lea.vmem %s3, %s367
      $region48: #{basic_block_forward.4} parent=39 // pred_fallthru
        _
    $region40: #{basic_block_forward.4} parent=5 // pred_fallthru
      _
  $region6: #{basic_block_forward.4} parent=0 // loop_footer
    %s14 = sadd.s32 1, %s10
  $region7: #{basic_block_forward.4} parent=0 // loop_footer_branch
    %9 = sbr.rel target = $region3
  $region8: #{basic_block_forward.4} parent=0 // loop_exit
    _

// kernel: basic_block_forward.7
$region0: #{basic_block_forward.7}
  #allocation0 [shape = 'u32[]', space=smem, size = 0x4, offset = 0x4, fixed_abs, tag = 'smem constant byte address 0x4 - core index']
  #allocation1 [shape = 'u32[72,128]{1,0:T(1,128)}', space=vmem, size = 0x9000, scoped, tag = 'internal scratch']
  %s0 = inlined_call_operand.vmem [shape: bf16[128,128], index: 0, kind: input, shape index: {}]
  %s1 = inlined_call_operand.vmem [shape: f32[2,128], index: 1, kind: input, shape index: {}]
  %s2 = inlined_call_operand.vmem [shape: bf16[128,128], index: 2, kind: input, shape index: {}]
  %s3 = inlined_call_operand.vmem [shape: f32[2,128], index: 3, kind: input, shape index: {}]
  %s4 = inlined_call_operand.vmem [shape: f32[128,128], index: 4, kind: output, shape index: {}]
  %s5 = sld [smem:[#allocation0]]
  $region49: #{basic_block_forward.7} parent=0
    _
  %s7 = ssub.s32 1, %s5
  %s8 = scalar_select 0, %s7, %s5
  loop: start=0, step=1, limit=4
  $region2: #{basic_block_forward.7} parent=0 // loop_pre_header
    _
  $region3: #{basic_block_forward.7} parent=0 // loop_header
    %s10 = sphi 0, %s14
    %p11 = scmp.ge.s32.totalorder %s10, 4
    %s20 = sphi 0, %s22
    %s23 = sphi 0, %s20
    %s24 = sphi 0, %s23
    %s40 = sphi 0, %s24
    %s44 = sphi 0, %s44
    %s46 = sphi 0, %s44
    %s47 = sphi 0, %s46
    %s61 = sphi 0, %s47
    %s67 = sphi 0, %s69
    %s70 = sphi 0, %s67
    %s71 = sphi 0, %s70
    %s87 = sphi 0, %s71
    %s91 = sphi 0, %s91
    %s93 = sphi 0, %s91
    %s94 = sphi 0, %s93
    %s108 = sphi 0, %s94
    %s114 = sphi 0, %s116
    %s117 = sphi 0, %s114
    %s118 = sphi 0, %s117
    %s134 = sphi 0, %s118
  $region4: #{basic_block_forward.7} parent=0 // loop_header_branch
    %13 = sbr.rel (%p11) target = $region8
  $region5: #{basic_block_forward.7} parent=0 // loop_body
    %s15 = ssub.s32 %s10, 1
    %s16 = ssub.s32 %s10, 2
    %s17 = sadd.s32 %s10, 1
    %s18 = ssub.s32 %s10, %s17
    %p19 = scmp.eq.s32.totalorder %s18, 0
    %s21 = sadd.s32 %s20, 1
    %s22 = scalar_select %p19, %s20, %s21
    %p25 = pneg %p19
    %p26 = scmp.eq.s32.totalorder %s10, 1
    %p27 = por %p25, %p26
    %p28 = scmp.ne.s32.totalorder %s20, %s23
    %p29 = scmp.eq.s32.totalorder %s10, 0
    %p30 = por %p28, %p29
    %p31 = scmp.ne.s32.totalorder %s20, %s23
    %p32 = scmp.eq.s32.totalorder %s15, 1
    %p33 = por %p31, %p32
    %p34 = scmp.ne.s32.totalorder %s23, %s24
    %p35 = scmp.eq.s32.totalorder %s15, 0
    %p36 = por %p34, %p35
    %p37 = scmp.ne.s32.totalorder %s23, %s24
    %p38 = scmp.eq.s32.totalorder %s16, 1
    %p39 = por %p37, %p38
    %p41 = scmp.ne.s32.totalorder %s24, %s40
    %p42 = scmp.eq.s32.totalorder %s16, 0
    %p43 = por %p41, %p42
    %s45 = sadd.s32 %s44, 1
    %p48 = scmp.eq.s32.totalorder %s10, 1
    %p49 = scmp.ne.s32.totalorder %s44, %s46
    %p50 = scmp.eq.s32.totalorder %s10, 0
    %p51 = por %p49, %p50
    %p52 = scmp.ne.s32.totalorder %s44, %s46
    %p53 = scmp.eq.s32.totalorder %s15, 1
    %p54 = por %p52, %p53
    %p55 = scmp.ne.s32.totalorder %s46, %s47
    %p56 = scmp.eq.s32.totalorder %s15, 0
    %p57 = por %p55, %p56
    %p58 = scmp.ne.s32.totalorder %s46, %s47
    %p59 = scmp.eq.s32.totalorder %s16, 1
    %p60 = por %p58, %p59
    %p62 = scmp.ne.s32.totalorder %s47, %s61
    %p63 = scmp.eq.s32.totalorder %s16, 0
    %p64 = por %p62, %p63
    %s65 = ssub.s32 %s10, %s17
    %p66 = scmp.eq.s32.totalorder %s65, 0
    %s68 = sadd.s32 %s67, 1
    %s69 = scalar_select %p66, %s67, %s68
    %p72 = pneg %p66
    %p73 = scmp.eq.s32.totalorder %s10, 1
    %p74 = por %p72, %p73
    %p75 = scmp.ne.s32.totalorder %s67, %s70
    %p76 = scmp.eq.s32.totalorder %s10, 0
    %p77 = por %p75, %p76
    %p78 = scmp.ne.s32.totalorder %s67, %s70
    %p79 = scmp.eq.s32.totalorder %s15, 1
    %p80 = por %p78, %p79
    %p81 = scmp.ne.s32.totalorder %s70, %s71
    %p82 = scmp.eq.s32.totalorder %s15, 0
    %p83 = por %p81, %p82
    %p84 = scmp.ne.s32.totalorder %s70, %s71
    %p85 = scmp.eq.s32.totalorder %s16, 1
    %p86 = por %p84, %p85
    %p88 = scmp.ne.s32.totalorder %s71, %s87
    %p89 = scmp.eq.s32.totalorder %s16, 0
    %p90 = por %p88, %p89
    %s92 = sadd.s32 %s91, 1
    %p95 = scmp.eq.s32.totalorder %s10, 1
    %p96 = scmp.ne.s32.totalorder %s91, %s93
    %p97 = scmp.eq.s32.totalorder %s10, 0
    %p98 = por %p96, %p97
    %p99 = scmp.ne.s32.totalorder %s91, %s93
    %p100 = scmp.eq.s32.totalorder %s15, 1
    %p101 = por %p99, %p100
    %p102 = scmp.ne.s32.totalorder %s93, %s94
    %p103 = scmp.eq.s32.totalorder %s15, 0
    %p104 = por %p102, %p103
    %p105 = scmp.ne.s32.totalorder %s93, %s94
    %p106 = scmp.eq.s32.totalorder %s16, 1
    %p107 = por %p105, %p106
    %p109 = scmp.ne.s32.totalorder %s94, %s108
    %p110 = scmp.eq.s32.totalorder %s16, 0
    %p111 = por %p109, %p110
    %s112 = ssub.s32 %s10, %s17
    %p113 = scmp.eq.s32.totalorder %s112, 0
    %s115 = sadd.s32 %s114, 1
    %s116 = scalar_select %p113, %s114, %s115
    %p119 = pneg %p113
    %p120 = scmp.eq.s32.totalorder %s10, 1
    %p121 = por %p119, %p120
    %p122 = scmp.ne.s32.totalorder %s114, %s117
    %p123 = scmp.eq.s32.totalorder %s10, 0
    %p124 = por %p122, %p123
    %p125 = scmp.ne.s32.totalorder %s114, %s117
    %p126 = scmp.eq.s32.totalorder %s15, 1
    %p127 = por %p125, %p126
    %p128 = scmp.ne.s32.totalorder %s117, %s118
    %p129 = scmp.eq.s32.totalorder %s15, 0
    %p130 = por %p128, %p129
    %p131 = scmp.ne.s32.totalorder %s117, %s118
    %p132 = scmp.eq.s32.totalorder %s16, 1
    %p133 = por %p131, %p132
    %p135 = scmp.ne.s32.totalorder %s118, %s134
    %p136 = scmp.eq.s32.totalorder %s16, 0
    %p137 = por %p135, %p136
    %p138 = scmp.le.s32.totalorder 1, %s10
    %p139 = scmp.lt.s32.totalorder %s10, 3
    %p140 = pnand %p138, %p139
    %p141 = pneg %p140
    // Predicated region
    $region9: #{basic_block_forward.7} parent=5 // pred_check
      _
    $region10: #{basic_block_forward.7} parent=5 // pred_check_branch
      %143 = sbr.rel (%p140) target = $region12
    $region11: #{basic_block_forward.7} parent=5 // pred_region
      %s144 = ssub.s32 %s10, 1
      // Predicated region
      $region13: #{basic_block_forward.7} parent=11 // pred_check
        %p145 = pneg %p57
      $region14: #{basic_block_forward.7} parent=11 // pred_check_branch
        %147 = sbr.rel (%p145) target = $region16
      $region15: #{basic_block_forward.7} parent=11 // pred_region
        _
      $region16: #{basic_block_forward.7} parent=11 // pred_fallthru
        _
      // Predicated region
      $region17: #{basic_block_forward.7} parent=11 // pred_check
        %p148 = pneg %p104
      $region18: #{basic_block_forward.7} parent=11 // pred_check_branch
        %150 = sbr.rel (%p148) target = $region20
      $region19: #{basic_block_forward.7} parent=11 // pred_region
        _
      $region20: #{basic_block_forward.7} parent=11 // pred_fallthru
        _
    $region12: #{basic_block_forward.7} parent=5 // pred_fallthru
      _
    %p151 = scmp.lt.s32.totalorder %s10, 2
    // Predicated region
    $region21: #{basic_block_forward.7} parent=5 // pred_check
      %p152 = pneg %p151
    $region22: #{basic_block_forward.7} parent=5 // pred_check_branch
      %154 = sbr.rel (%p152) target = $region24
    $region23: #{basic_block_forward.7} parent=5 // pred_region
      // Predicated region
      $region25: #{basic_block_forward.7} parent=23 // pred_check
        %p155 = pneg %p30
      $region26: #{basic_block_forward.7} parent=23 // pred_check_branch
        %157 = sbr.rel (%p155) target = $region28
      $region27: #{basic_block_forward.7} parent=23 // pred_region
        %s158 = smul.u32 8, %s10
        %p159 = scmp.lt.s32.totalorder %s158, 15
        %s160 = scalar_select %p159, %s158, 15
        %s161 = smul.addr %s160, 4
        %s162 = scalar_lea.vmem %s0, %s161
        %s163 = smul.u32 8, %s10
      $region28: #{basic_block_forward.7} parent=23 // pred_fallthru
        _
      // Predicated region
      $region29: #{basic_block_forward.7} parent=23 // pred_check
        %p164 = pneg %p77
      $region30: #{basic_block_forward.7} parent=23 // pred_check_branch
        %166 = sbr.rel (%p164) target = $region32
      $region31: #{basic_block_forward.7} parent=23 // pred_region
        %s167 = smul.u32 8, %s10
        %p168 = scmp.lt.s32.totalorder %s167, 15
        %s169 = scalar_select %p168, %s167, 15
        %s170 = smul.addr %s169, 4
        %s171 = scalar_lea.vmem %s2, %s170
        %s172 = smul.u32 8, %s10
      $region32: #{basic_block_forward.7} parent=23 // pred_fallthru
        _
    $region24: #{basic_block_forward.7} parent=5 // pred_fallthru
      _
    %p173 = scmp.le.s32.totalorder 1, %s10
    %p174 = scmp.lt.s32.totalorder %s10, 3
    %p175 = pnand %p173, %p174
    %p176 = pneg %p175
    // Predicated region
    $region33: #{basic_block_forward.7} parent=5 // pred_check
      _
    $region34: #{basic_block_forward.7} parent=5 // pred_check_branch
      %178 = sbr.rel (%p175) target = $region36
    $region35: #{basic_block_forward.7} parent=5 // pred_region
      %s179 = ssub.s32 %s10, 1
      %s180 = smul.u32 8, %s15
      %p181 = scmp.lt.s32.totalorder %s180, 15
      %s182 = scalar_select %p181, %s180, 15
      %s183 = smul.addr %s182, 4
      %s184 = scalar_lea.vmem %s0, %s183
      %p185 = pneg %p36
      %p186 = pneg %p33
      %p187 = pneg %p57
      %p188 = pneg %p54
      %s189 = smul.u32 8, %s15
      %p190 = scmp.lt.s32.totalorder %s189, 15
      %s191 = scalar_select %p190, %s189, 15
      %s192 = smul.addr %s191, 4
      %s193 = scalar_lea.vmem %s2, %s192
      %p194 = pneg %p83
      %p195 = pneg %p80
      %p196 = pneg %p104
      %p197 = pneg %p101
      %p198 = pneg %p130
      %p199 = pneg %p127
      %s200 = smul.u32 8, %s15
      %p201 = scmp.lt.s32.totalorder %s200, 15
      %s202 = scalar_select %p201, %s200, 15
      %s203 = smul.addr %s202, 8
      %s204 = scalar_lea.vmem %s4, %s203
      %s205 = smul.u32 8, %s15
      %p206 = scmp.lt.s32.totalorder %s205, 15
      %s207 = scalar_select %p206, %s205, 15
      %s208 = smul.addr %s207, 4
      %s209 = scalar_lea.vmem %s0, %s208
      %s210 = smul.u32 8, %s15
      %s211 = smul.u32 8, %s15
      %p212 = scmp.lt.s32.totalorder %s211, 15
      %s213 = scalar_select %p212, %s211, 15
      %s214 = smul.addr %s213, 4
      %s215 = scalar_lea.vmem %s2, %s214
      %s216 = smul.u32 8, %s15
      %s217 = smul.u32 8, %s15
      %p218 = scmp.lt.s32.totalorder %s217, 15
      %s219 = scalar_select %p218, %s217, 15
      %s220 = smul.addr %s219, 8
      %s221 = scalar_lea.vmem %s4, %s220
      %s222 = smul.u32 8, %s15
      %v223 = vld [vmem:[%s209] sm:$0xf]
      %v224 = vld [vmem:[%s209 + $0x4] sm:$0xf]
      %v225 = vld [vmem:[%s209 + $0x8] sm:$0xf]
      %v226 = vld [vmem:[%s209 + $0xc] sm:$0xf]
      %v227 = vld [vmem:[%s209 + $0x10] sm:$0xf]
      %v228 = vld [vmem:[%s209 + $0x14] sm:$0xf]
      %v229 = vld [vmem:[%s209 + $0x18] sm:$0xf]
      %v230 = vld [vmem:[%s209 + $0x1c] sm:$0xf]
      %v231 = vunpack.c.l.bf16 %v223
      %v232 = vunpack.c.l.bf16 %v224
      %v233 = vunpack.c.l.bf16 %v225
      %v234 = vunpack.c.l.bf16 %v226
      %v235 = vunpack.c.l.bf16 %v227
      %v236 = vunpack.c.l.bf16 %v228
      %v237 = vunpack.c.l.bf16 %v229
      %v238 = vunpack.c.l.bf16 %v230
      %v239 = vld [vmem:[%s1] sm:$0x1]
      %v240 = vperm.slane %v239, 0
      %v241 = vmul.f32 %v231, %v240
      %v242 = vmul.f32 %v232, %v240
      %v243 = vmul.f32 %v233, %v240
      %v244 = vmul.f32 %v234, %v240
      %v245 = vmul.f32 %v235, %v240
      %v246 = vmul.f32 %v236, %v240
      %v247 = vmul.f32 %v237, %v240
      %v248 = vmul.f32 %v238, %v240
      %v249 = vld [vmem:[%s1 + $0x1] sm:$0x1]
      %v250 = vperm.slane %v249, 0
      %v251 = vadd.f32 %v241, %v250
      %v252 = vadd.f32 %v242, %v250
      %v253 = vadd.f32 %v243, %v250
      %v254 = vadd.f32 %v244, %v250
      %v255 = vadd.f32 %v245, %v250
      %v256 = vadd.f32 %v246, %v250
      %v257 = vadd.f32 %v247, %v250
      %v258 = vadd.f32 %v248, %v250
      %v259 = vld [vmem:[%s215] sm:$0xf]
      %v260 = vld [vmem:[%s215 + $0x4] sm:$0xf]
      %v261 = vld [vmem:[%s215 + $0x8] sm:$0xf]
      %v262 = vld [vmem:[%s215 + $0xc] sm:$0xf]
      %v263 = vld [vmem:[%s215 + $0x10] sm:$0xf]
      %v264 = vld [vmem:[%s215 + $0x14] sm:$0xf]
      %v265 = vld [vmem:[%s215 + $0x18] sm:$0xf]
      %v266 = vld [vmem:[%s215 + $0x1c] sm:$0xf]
      %v267 = vunpack.c.l.bf16 %v259
      %v268 = vunpack.c.l.bf16 %v260
      %v269 = vunpack.c.l.bf16 %v261
      %v270 = vunpack.c.l.bf16 %v262
      %v271 = vunpack.c.l.bf16 %v263
      %v272 = vunpack.c.l.bf16 %v264
      %v273 = vunpack.c.l.bf16 %v265
      %v274 = vunpack.c.l.bf16 %v266
      %v275 = vld [vmem:[%s3] sm:$0x1]
      %v276 = vperm.slane %v275, 0
      %v277 = vmul.f32 %v267, %v276
      %v278 = vmul.f32 %v268, %v276
      %v279 = vmul.f32 %v269, %v276
      %v280 = vmul.f32 %v270, %v276
      %v281 = vmul.f32 %v271, %v276
      %v282 = vmul.f32 %v272, %v276
      %v283 = vmul.f32 %v273, %v276
      %v284 = vmul.f32 %v274, %v276
      %v285 = vadd.f32 %v251, %v277
      %v286 = vadd.f32 %v252, %v278
      %v287 = vadd.f32 %v253, %v279
      %v288 = vadd.f32 %v254, %v280
      %v289 = vadd.f32 %v255, %v281
      %v290 = vadd.f32 %v256, %v282
      %v291 = vadd.f32 %v257, %v283
      %v292 = vadd.f32 %v258, %v284
      %v293 = vld [vmem:[%s3 + $0x1] sm:$0x1]
      %v294 = vperm.slane %v293, 0
      %v295 = vadd.f32 %v285, %v294
      %v296 = vadd.f32 %v286, %v294
      %v297 = vadd.f32 %v287, %v294
      %v298 = vadd.f32 %v288, %v294
      %v299 = vadd.f32 %v289, %v294
      %v300 = vadd.f32 %v290, %v294
      %v301 = vadd.f32 %v291, %v294
      %v302 = vadd.f32 %v292, %v294
      %v303 = vmax.f32 %v295, 0.0
      %v304 = vmax.f32 %v296, 0.0
      %v305 = vmax.f32 %v297, 0.0
      %v306 = vmax.f32 %v298, 0.0
      %v307 = vmax.f32 %v299, 0.0
      %v308 = vmax.f32 %v300, 0.0
      %v309 = vmax.f32 %v301, 0.0
      %v310 = vmax.f32 %v302, 0.0
      %311 = vst [vmem:[%s221] sm:$0xff] %v303
      %312 = vst [vmem:[%s221 + $0x8] sm:$0xff] %v304
      %313 = vst [vmem:[%s221 + $0x10] sm:$0xff] %v305
      %314 = vst [vmem:[%s221 + $0x18] sm:$0xff] %v306
      %315 = vst [vmem:[%s221 + $0x20] sm:$0xff] %v307
      %316 = vst [vmem:[%s221 + $0x28] sm:$0xff] %v308
      %317 = vst [vmem:[%s221 + $0x30] sm:$0xff] %v309
      %318 = vst [vmem:[%s221 + $0x38] sm:$0xff] %v310
      %s319 = smul.u32 8, %s15
      %p320 = scmp.lt.s32.totalorder %s319, 15
      %s321 = scalar_select %p320, %s319, 15
      %s322 = smul.addr %s321, 8
      %s323 = scalar_lea.vmem %s4, %s322
      // Predicated region
      $region37: #{basic_block_forward.7} parent=35 // pred_check
        %p324 = pneg %p127
      $region38: #{basic_block_forward.7} parent=35 // pred_check_branch
        %326 = sbr.rel (%p324) target = $region40
      $region39: #{basic_block_forward.7} parent=35 // pred_region
        %s327 = smul.u32 8, %s15
      $region40: #{basic_block_forward.7} parent=35 // pred_fallthru
        _
    $region36: #{basic_block_forward.7} parent=5 // pred_fallthru
      _
    %p328 = scmp.le.s32.totalorder 2, %s10
    // Predicated region
    $region41: #{basic_block_forward.7} parent=5 // pred_check
      %p329 = pneg %p328
    $region42: #{basic_block_forward.7} parent=5 // pred_check_branch
      %331 = sbr.rel (%p329) target = $region44
    $region43: #{basic_block_forward.7} parent=5 // pred_region
      %s332 = ssub.s32 %s10, 2
      // Predicated region
      $region45: #{basic_block_forward.7} parent=43 // pred_check
        %p333 = pneg %p133
      $region46: #{basic_block_forward.7} parent=43 // pred_check_branch
        %335 = sbr.rel (%p333) target = $region48
      $region47: #{basic_block_forward.7} parent=43 // pred_region
        %s336 = smul.u32 8, %s16
        %p337 = scmp.lt.s32.totalorder %s336, 15
        %s338 = scalar_select %p337, %s336, 15
        %s339 = smul.addr %s338, 8
        %s340 = scalar_lea.vmem %s4, %s339
      $region48: #{basic_block_forward.7} parent=43 // pred_fallthru
        _
    $region44: #{basic_block_forward.7} parent=5 // pred_fallthru
      _
  $region6: #{basic_block_forward.7} parent=0 // loop_footer
    %s14 = sadd.s32 1, %s10
  $region7: #{basic_block_forward.7} parent=0 // loop_footer_branch
    %9 = sbr.rel target = $region3
  $region8: #{basic_block_forward.7} parent=0 // loop_exit
    _

// kernel: basic_block_forward.6
$region0: #{basic_block_forward.6}
  #allocation0 [shape = 'u32[]', space=smem, size = 0x4, offset = 0x4, fixed_abs, tag = 'smem constant byte address 0x4 - core index']
  #allocation1 [shape = 'u32[72,128]{1,0:T(1,128)}', space=vmem, size = 0x9000, scoped, tag = 'internal scratch']
  %s0 = inlined_call_operand.vmem [shape: bf16[128,80], index: 0, kind: input, shape index: {}]
  %s1 = inlined_call_operand.vmem [shape: bf16[80,128], index: 1, kind: input, shape index: {}]
  %s2 = inlined_call_operand.vmem [shape: bf16[128,16], index: 2, kind: input, shape index: {}]
  %s3 = inlined_call_operand.vmem [shape: bf16[16,128], index: 3, kind: input, shape index: {}]
  %s4 = inlined_call_operand.vmem [shape: bf16[128,128], index: 4, kind: output, shape index: {0}]
  %s5 = inlined_call_operand.vmem [shape: bf16[128,128], index: 5, kind: output, shape index: {1}]
  %s6 = inlined_call_operand.vmem [shape: f32[2,2,128], index: 6, kind: output, shape index: {2}]
  %s7 = inlined_call_operand.vmem [shape: f32[2,2,128], index: 7, kind: output, shape index: {3}]
  %8 = xla_tuple %s4, %s5, %s6, %s7
  %s9 = sld [smem:[#allocation0]]
  $region73: #{basic_block_forward.6} parent=0
    _
  %s11 = ssub.s32 1, %s9
  %s12 = scalar_select 0, %s11, %s9
  loop: start=0, step=1, limit=4
  $region2: #{basic_block_forward.6} parent=0 // loop_pre_header
    _
  $region3: #{basic_block_forward.6} parent=0 // loop_header
    %s14 = sphi 0, %s18
    %p15 = scmp.ge.s32.totalorder %s14, 4
    %s24 = sphi 0, %s26
    %s27 = sphi 0, %s24
    %s28 = sphi 0, %s27
    %s44 = sphi 0, %s28
    %s48 = sphi 0, %s48
    %s50 = sphi 0, %s48
    %s51 = sphi 0, %s50
    %s65 = sphi 0, %s51
    %s71 = sphi 0, %s73
    %s74 = sphi 0, %s71
    %s75 = sphi 0, %s74
    %s91 = sphi 0, %s75
    %s95 = sphi 0, %s95
    %s97 = sphi 0, %s95
    %s98 = sphi 0, %s97
    %s112 = sphi 0, %s98
    %s118 = sphi 0, %s120
    %s121 = sphi 0, %s118
    %s122 = sphi 0, %s121
    %s138 = sphi 0, %s122
    %s144 = sphi 0, %s146
    %s147 = sphi 0, %s144
    %s148 = sphi 0, %s147
    %s164 = sphi 0, %s148
    %s170 = sphi 0, %s172
    %s173 = sphi 0, %s170
    %s174 = sphi 0, %s173
    %s190 = sphi 0, %s174
    %s196 = sphi 0, %s198
    %s199 = sphi 0, %s196
    %s200 = sphi 0, %s199
    %s216 = sphi 0, %s200
  $region4: #{basic_block_forward.6} parent=0 // loop_header_branch
    %17 = sbr.rel (%p15) target = $region8
  $region5: #{basic_block_forward.6} parent=0 // loop_body
    %s19 = ssub.s32 %s14, 1
    %s20 = ssub.s32 %s14, 2
    %s21 = sadd.s32 %s14, 1
    %s22 = ssub.s32 %s14, %s21
    %p23 = scmp.eq.s32.totalorder %s22, 0
    %s25 = sadd.s32 %s24, 1
    %s26 = scalar_select %p23, %s24, %s25
    %p29 = pneg %p23
    %p30 = scmp.eq.s32.totalorder %s14, 1
    %p31 = por %p29, %p30
    %p32 = scmp.ne.s32.totalorder %s24, %s27
    %p33 = scmp.eq.s32.totalorder %s14, 0
    %p34 = por %p32, %p33
    %p35 = scmp.ne.s32.totalorder %s24, %s27
    %p36 = scmp.eq.s32.totalorder %s19, 1
    %p37 = por %p35, %p36
    %p38 = scmp.ne.s32.totalorder %s27, %s28
    %p39 = scmp.eq.s32.totalorder %s19, 0
    %p40 = por %p38, %p39
    %p41 = scmp.ne.s32.totalorder %s27, %s28
    %p42 = scmp.eq.s32.totalorder %s20, 1
    %p43 = por %p41, %p42
    %p45 = scmp.ne.s32.totalorder %s28, %s44
    %p46 = scmp.eq.s32.totalorder %s20, 0
    %p47 = por %p45, %p46
    %s49 = sadd.s32 %s48, 1
    %p52 = scmp.eq.s32.totalorder %s14, 1
    %p53 = scmp.ne.s32.totalorder %s48, %s50
    %p54 = scmp.eq.s32.totalorder %s14, 0
    %p55 = por %p53, %p54
    %p56 = scmp.ne.s32.totalorder %s48, %s50
    %p57 = scmp.eq.s32.totalorder %s19, 1
    %p58 = por %p56, %p57
    %p59 = scmp.ne.s32.totalorder %s50, %s51
    %p60 = scmp.eq.s32.totalorder %s19, 0
    %p61 = por %p59, %p60
    %p62 = scmp.ne.s32.totalorder %s50, %s51
    %p63 = scmp.eq.s32.totalorder %s20, 1
    %p64 = por %p62, %p63
    %p66 = scmp.ne.s32.totalorder %s51, %s65
    %p67 = scmp.eq.s32.totalorder %s20, 0
    %p68 = por %p66, %p67
    %s69 = ssub.s32 %s14, %s21
    %p70 = scmp.eq.s32.totalorder %s69, 0
    %s72 = sadd.s32 %s71, 1
    %s73 = scalar_select %p70, %s71, %s72
    %p76 = pneg %p70
    %p77 = scmp.eq.s32.totalorder %s14, 1
    %p78 = por %p76, %p77
    %p79 = scmp.ne.s32.totalorder %s71, %s74
    %p80 = scmp.eq.s32.totalorder %s14, 0
    %p81 = por %p79, %p80
    %p82 = scmp.ne.s32.totalorder %s71, %s74
    %p83 = scmp.eq.s32.totalorder %s19, 1
    %p84 = por %p82, %p83
    %p85 = scmp.ne.s32.totalorder %s74, %s75
    %p86 = scmp.eq.s32.totalorder %s19, 0
    %p87 = por %p85, %p86
    %p88 = scmp.ne.s32.totalorder %s74, %s75
    %p89 = scmp.eq.s32.totalorder %s20, 1
    %p90 = por %p88, %p89
    %p92 = scmp.ne.s32.totalorder %s75, %s91
    %p93 = scmp.eq.s32.totalorder %s20, 0
    %p94 = por %p92, %p93
    %s96 = sadd.s32 %s95, 1
    %p99 = scmp.eq.s32.totalorder %s14, 1
    %p100 = scmp.ne.s32.totalorder %s95, %s97
    %p101 = scmp.eq.s32.totalorder %s14, 0
    %p102 = por %p100, %p101
    %p103 = scmp.ne.s32.totalorder %s95, %s97
    %p104 = scmp.eq.s32.totalorder %s19, 1
    %p105 = por %p103, %p104
    %p106 = scmp.ne.s32.totalorder %s97, %s98
    %p107 = scmp.eq.s32.totalorder %s19, 0
    %p108 = por %p106, %p107
    %p109 = scmp.ne.s32.totalorder %s97, %s98
    %p110 = scmp.eq.s32.totalorder %s20, 1
    %p111 = por %p109, %p110
    %p113 = scmp.ne.s32.totalorder %s98, %s112
    %p114 = scmp.eq.s32.totalorder %s20, 0
    %p115 = por %p113, %p114
    %s116 = ssub.s32 %s14, %s21
    %p117 = scmp.eq.s32.totalorder %s116, 0
    %s119 = sadd.s32 %s118, 1
    %s120 = scalar_select %p117, %s118, %s119
    %p123 = pneg %p117
    %p124 = scmp.eq.s32.totalorder %s14, 1
    %p125 = por %p123, %p124
    %p126 = scmp.ne.s32.totalorder %s118, %s121
    %p127 = scmp.eq.s32.totalorder %s14, 0
    %p128 = por %p126, %p127
    %p129 = scmp.ne.s32.totalorder %s118, %s121
    %p130 = scmp.eq.s32.totalorder %s19, 1
    %p131 = por %p129, %p130
    %p132 = scmp.ne.s32.totalorder %s121, %s122
    %p133 = scmp.eq.s32.totalorder %s19, 0
    %p134 = por %p132, %p133
    %p135 = scmp.ne.s32.totalorder %s121, %s122
    %p136 = scmp.eq.s32.totalorder %s20, 1
    %p137 = por %p135, %p136
    %p139 = scmp.ne.s32.totalorder %s122, %s138
    %p140 = scmp.eq.s32.totalorder %s20, 0
    %p141 = por %p139, %p140
    %s142 = ssub.s32 %s14, %s21
    %p143 = scmp.eq.s32.totalorder %s142, 0
    %s145 = sadd.s32 %s144, 1
    %s146 = scalar_select %p143, %s144, %s145
    %p149 = pneg %p143
    %p150 = scmp.eq.s32.totalorder %s14, 1
    %p151 = por %p149, %p150
    %p152 = scmp.ne.s32.totalorder %s144, %s147
    %p153 = scmp.eq.s32.totalorder %s14, 0
    %p154 = por %p152, %p153
    %p155 = scmp.ne.s32.totalorder %s144, %s147
    %p156 = scmp.eq.s32.totalorder %s19, 1
    %p157 = por %p155, %p156
    %p158 = scmp.ne.s32.totalorder %s147, %s148
    %p159 = scmp.eq.s32.totalorder %s19, 0
    %p160 = por %p158, %p159
    %p161 = scmp.ne.s32.totalorder %s147, %s148
    %p162 = scmp.eq.s32.totalorder %s20, 1
    %p163 = por %p161, %p162
    %p165 = scmp.ne.s32.totalorder %s148, %s164
    %p166 = scmp.eq.s32.totalorder %s20, 0
    %p167 = por %p165, %p166
    %s168 = ssub.s32 %s14, %s21
    %p169 = scmp.eq.s32.totalorder %s168, 0
    %s171 = sadd.s32 %s170, 1
    %s172 = scalar_select %p169, %s170, %s171
    %p175 = pneg %p169
    %p176 = scmp.eq.s32.totalorder %s14, 1
    %p177 = por %p175, %p176
    %p178 = scmp.ne.s32.totalorder %s170, %s173
    %p179 = scmp.eq.s32.totalorder %s14, 0
    %p180 = por %p178, %p179
    %p181 = scmp.ne.s32.totalorder %s170, %s173
    %p182 = scmp.eq.s32.totalorder %s19, 1
    %p183 = por %p181, %p182
    %p184 = scmp.ne.s32.totalorder %s173, %s174
    %p185 = scmp.eq.s32.totalorder %s19, 0
    %p186 = por %p184, %p185
    %p187 = scmp.ne.s32.totalorder %s173, %s174
    %p188 = scmp.eq.s32.totalorder %s20, 1
    %p189 = por %p187, %p188
    %p191 = scmp.ne.s32.totalorder %s174, %s190
    %p192 = scmp.eq.s32.totalorder %s20, 0
    %p193 = por %p191, %p192
    %s194 = ssub.s32 %s14, %s21
    %p195 = scmp.eq.s32.totalorder %s194, 0
    %s197 = sadd.s32 %s196, 1
    %s198 = scalar_select %p195, %s196, %s197
    %p201 = pneg %p195
    %p202 = scmp.eq.s32.totalorder %s14, 1
    %p203 = por %p201, %p202
    %p204 = scmp.ne.s32.totalorder %s196, %s199
    %p205 = scmp.eq.s32.totalorder %s14, 0
    %p206 = por %p204, %p205
    %p207 = scmp.ne.s32.totalorder %s196, %s199
    %p208 = scmp.eq.s32.totalorder %s19, 1
    %p209 = por %p207, %p208
    %p210 = scmp.ne.s32.totalorder %s199, %s200
    %p211 = scmp.eq.s32.totalorder %s19, 0
    %p212 = por %p210, %p211
    %p213 = scmp.ne.s32.totalorder %s199, %s200
    %p214 = scmp.eq.s32.totalorder %s20, 1
    %p215 = por %p213, %p214
    %p217 = scmp.ne.s32.totalorder %s200, %s216
    %p218 = scmp.eq.s32.totalorder %s20, 0
    %p219 = por %p217, %p218
    %p220 = scmp.le.s32.totalorder 1, %s14
    %p221 = scmp.lt.s32.totalorder %s14, 3
    %p222 = pnand %p220, %p221
    %p223 = pneg %p222
    // Predicated region
    $region9: #{basic_block_forward.6} parent=5 // pred_check
      _
    $region10: #{basic_block_forward.6} parent=5 // pred_check_branch
      %225 = sbr.rel (%p222) target = $region12
    $region11: #{basic_block_forward.6} parent=5 // pred_region
      %s226 = ssub.s32 %s14, 1
      // Predicated region
      $region13: #{basic_block_forward.6} parent=11 // pred_check
        %p227 = pneg %p61
      $region14: #{basic_block_forward.6} parent=11 // pred_check_branch
        %229 = sbr.rel (%p227) target = $region16
      $region15: #{basic_block_forward.6} parent=11 // pred_region
        _
      $region16: #{basic_block_forward.6} parent=11 // pred_fallthru
        _
      // Predicated region
      $region17: #{basic_block_forward.6} parent=11 // pred_check
        %p230 = pneg %p108
      $region18: #{basic_block_forward.6} parent=11 // pred_check_branch
        %232 = sbr.rel (%p230) target = $region20
      $region19: #{basic_block_forward.6} parent=11 // pred_region
        _
      $region20: #{basic_block_forward.6} parent=11 // pred_fallthru
        _
    $region12: #{basic_block_forward.6} parent=5 // pred_fallthru
      _
    %p233 = scmp.lt.s32.totalorder %s14, 2
    // Predicated region
    $region21: #{basic_block_forward.6} parent=5 // pred_check
      %p234 = pneg %p233
    $region22: #{basic_block_forward.6} parent=5 // pred_check_branch
      %236 = sbr.rel (%p234) target = $region24
    $region23: #{basic_block_forward.6} parent=5 // pred_region
      // Predicated region
      $region25: #{basic_block_forward.6} parent=23 // pred_check
        %p237 = pneg %p34
      $region26: #{basic_block_forward.6} parent=23 // pred_check_branch
        %239 = sbr.rel (%p237) target = $region28
      $region27: #{basic_block_forward.6} parent=23 // pred_region
        %s240 = smul.u32 8, %s14
        %p241 = scmp.lt.s32.totalorder %s240, 15
        %s242 = scalar_select %p241, %s240, 15
        %s243 = smul.addr %s242, 4
        %s244 = scalar_lea.vmem %s0, %s243
        %s245 = smul.u32 8, %s14
      $region28: #{basic_block_forward.6} parent=23 // pred_fallthru
        _
      // Predicated region
      $region29: #{basic_block_forward.6} parent=23 // pred_check
        %p246 = pneg %p81
      $region30: #{basic_block_forward.6} parent=23 // pred_check_branch
        %248 = sbr.rel (%p246) target = $region32
      $region31: #{basic_block_forward.6} parent=23 // pred_region
        %s249 = smul.u32 8, %s14
        %p250 = scmp.lt.s32.totalorder %s249, 15
        %s251 = scalar_select %p250, %s249, 15
        %s252 = smul.addr %s251, 4
        %s253 = scalar_lea.vmem %s2, %s252
        %s254 = smul.u32 8, %s14
      $region32: #{basic_block_forward.6} parent=23 // pred_fallthru
        _
    $region24: #{basic_block_forward.6} parent=5 // pred_fallthru
      _
    %p255 = scmp.le.s32.totalorder 1, %s14
    %p256 = scmp.lt.s32.totalorder %s14, 3
    %p257 = pnand %p255, %p256
    %p258 = pneg %p257
    // Predicated region
    $region33: #{basic_block_forward.6} parent=5 // pred_check
      _
    $region34: #{basic_block_forward.6} parent=5 // pred_check_branch
      %260 = sbr.rel (%p257) target = $region36
    $region35: #{basic_block_forward.6} parent=5 // pred_region
      %s261 = ssub.s32 %s14, 1
      %s262 = smul.u32 8, %s19
      %p263 = scmp.lt.s32.totalorder %s262, 15
      %s264 = scalar_select %p263, %s262, 15
      %s265 = smul.addr %s264, 4
      %s266 = scalar_lea.vmem %s0, %s265
      %p267 = pneg %p40
      %p268 = pneg %p37
      %p269 = pneg %p61
      %p270 = pneg %p58
      %s271 = smul.u32 8, %s19
      %p272 = scmp.lt.s32.totalorder %s271, 15
      %s273 = scalar_select %p272, %s271, 15
      %s274 = smul.addr %s273, 4
      %s275 = scalar_lea.vmem %s2, %s274
      %p276 = pneg %p87
      %p277 = pneg %p84
      %p278 = pneg %p108
      %p279 = pneg %p105
      %p280 = pneg %p134
      %p281 = pneg %p131
      %s282 = smul.u32 8, %s19
      %p283 = scmp.lt.s32.totalorder %s282, 15
      %s284 = scalar_select %p283, %s282, 15
      %s285 = smul.addr %s284, 4
      %s286 = scalar_lea.vmem %s4, %s285
      %p287 = pneg %p160
      %p288 = pneg %p157
      %s289 = smul.u32 8, %s19
      %p290 = scmp.lt.s32.totalorder %s289, 15
      %s291 = scalar_select %p290, %s289, 15
      %s292 = smul.addr %s291, 4
      %s293 = scalar_lea.vmem %s5, %s292
      %p294 = pneg %p186
      %p295 = pneg %p183
      %p296 = scmp.lt.s32.totalorder %s19, 1
      %s297 = scalar_select %p296, %s19, 1
      %s298 = smul.addr %s297, 2
      %s299 = scalar_lea.vmem %s6, %s298
      %p300 = pneg %p212
      %p301 = pneg %p209
      %p302 = scmp.lt.s32.totalorder %s19, 1
      %s303 = scalar_select %p302, %s19, 1
      %s304 = smul.addr %s303, 2
      %s305 = scalar_lea.vmem %s7, %s304
      %s306 = smul.u32 8, %s19
      %p307 = scmp.lt.s32.totalorder %s306, 15
      %s308 = scalar_select %p307, %s306, 15
      %s309 = smul.addr %s308, 4
      %s310 = scalar_lea.vmem %s0, %s309
      %s311 = smul.u32 8, %s19
      %s312 = smul.u32 8, %s19
      %p313 = scmp.lt.s32.totalorder %s312, 15
      %s314 = scalar_select %p313, %s312, 15
      %s315 = smul.addr %s314, 4
      %s316 = scalar_lea.vmem %s2, %s315
      %s317 = smul.u32 8, %s19
      %s318 = smul.u32 8, %s19
      %p319 = scmp.lt.s32.totalorder %s318, 15
      %s320 = scalar_select %p319, %s318, 15
      %s321 = smul.addr %s320, 4
      %s322 = scalar_lea.vmem %s4, %s321
      %s323 = smul.u32 8, %s19
      %s324 = smul.u32 8, %s19
      %p325 = scmp.lt.s32.totalorder %s324, 15
      %s326 = scalar_select %p325, %s324, 15
      %s327 = smul.addr %s326, 4
      %s328 = scalar_lea.vmem %s5, %s327
      %s329 = smul.u32 8, %s19
      %p330 = scmp.lt.s32.totalorder %s19, 1
      %s331 = scalar_select %p330, %s19, 1
      %s332 = smul.addr %s331, 2
      %s333 = scalar_lea.vmem %s6, %s332
      %p334 = scmp.lt.s32.totalorder %s19, 1
      %s335 = scalar_select %p334, %s19, 1
      %s336 = smul.addr %s335, 2
      %s337 = scalar_lea.vmem %s7, %s336
      %v339 = vld [vmem:[%s310] sm:$0xf]
      %v340 = vld [vmem:[%s310 + $0x4] sm:$0xf]
      %v341 = vld [vmem:[%s310 + $0x8] sm:$0xf]
      %v342 = vld [vmem:[%s310 + $0xc] sm:$0xf]
      %v343 = vld [vmem:[%s310 + $0x10] sm:$0xf]
      %v344 = vld [vmem:[%s310 + $0x14] sm:$0xf]
      %v345 = vld [vmem:[%s310 + $0x18] sm:$0xf]
      %v346 = vld [vmem:[%s310 + $0x1c] sm:$0xf]
      %v347 = vld [vmem:[%s1] sm:$0xf]
      %v348 = vld [vmem:[%s1 + $0x4] sm:$0xf]
      %v349 = vld [vmem:[%s1 + $0x8] sm:$0xf]
      %v350 = vld [vmem:[%s1 + $0xc] sm:$0xf]
      %v351 = vld [vmem:[%s1 + $0x10] sm:$0xf]
      %v352 = vld [vmem:[%s1 + $0x14] sm:$0xf]
      %v353 = vld [vmem:[%s1 + $0x18] sm:$0xf]
      %v354 = vld [vmem:[%s1 + $0x1c] sm:$0xf]
      %v355 = vld [vmem:[%s1 + $0x20] sm:$0xf]
      %v356 = vld [vmem:[%s1 + $0x24] sm:$0xf]
      %v365 = vunpack.c.l.b16 %v339
      %v366 = vunpack.c.l.b16 %v340
      %v367 = vunpack.c.l.b16 %v341
      %v368 = vunpack.c.l.b16 %v342
      %v369 = vunpack.c.l.b16 %v343
      %v370 = vunpack.c.l.b16 %v344
      %v371 = vunpack.c.l.b16 %v345
      %v372 = vunpack.c.l.b16 %v346
      %v373 = vpack.c.b16 %v366, %v365
      %v374 = vpack.c.b16 %v368, %v367
      %v375 = vpack.c.b16 %v370, %v369
      %v376 = vpack.c.b16 %v372, %v371
      %v387 = vunpack.c.l.b16 %v347
      %v388 = vunpack.c.l.b16 %v348
      %v389 = vunpack.c.l.b16 %v349
      %v390 = vunpack.c.l.b16 %v350
      %v391 = vunpack.c.l.b16 %v351
      %v392 = vunpack.c.l.b16 %v352
      %v393 = vunpack.c.l.b16 %v353
      %v394 = vunpack.c.l.b16 %v354
      %v395 = vunpack.c.l.b16 %v355
      %v396 = vunpack.c.l.b16 %v356
      %v397 = vpack.c.b16 %v388, %v387
      %v398 = vpack.c.b16 %v390, %v389
      %v399 = vpack.c.b16 %v392, %v391
      %v400 = vpack.c.b16 %v394, %v393
      %v401 = vpack.c.b16 %v396, %v395
      %vm407 = vcmask 654336
      %v409 = vsel %vm407, %v373, 0
      %v412 = vsel %vm407, %v374, 0
      %v415 = vsel %vm407, %v375, 0
      %v418 = vsel %vm407, %v376, 0
      %420 = vmatpush.bf16.msra.mxu0 0
      %421 = vmatpush.bf16.msra.mxu0 0
      %422 = vmatpush.bf16.msra.mxu0 0
      %423 = vmatpush.bf16.msra.mxu0 %v401
      %424 = vmatpush.bf16.msra.mxu0 %v400
      %425 = vmatpush.bf16.msra.mxu0 %v399
      %426 = vmatpush.bf16.msra.mxu0 %v398
      %427 = vmatpush.bf16.msra.mxu0 %v397
      %428 = vmatmul.bf16.gmra.mxu0 %v409
      %v429 = vpop.f32.mrf.mxu0
      %v430 = vadd.f32 0.0, %v429
      %v431 = vpop.f32.mrf.mxu0
      %v432 = vadd.f32 0.0, %v431
      %433 = vmatmul.bf16.gmra.mxu0 %v412
      %v434 = vpop.f32.mrf.mxu0
      %v435 = vadd.f32 0.0, %v434
      %v436 = vpop.f32.mrf.mxu0
      %v437 = vadd.f32 0.0, %v436
      %438 = vmatmul.bf16.gmra.mxu0 %v415
      %v439 = vpop.f32.mrf.mxu0
      %v440 = vadd.f32 0.0, %v439
      %v441 = vpop.f32.mrf.mxu0
      %v442 = vadd.f32 0.0, %v441
      %443 = vmatmul.bf16.gmra.mxu0 %v418
      %v444 = vpop.f32.mrf.mxu0
      %v445 = vadd.f32 0.0, %v444
      %v446 = vpop.f32.mrf.mxu0
      %v447 = vadd.f32 0.0, %v446
      %448 = vdwg.mxu0
      %v449 = vld [vmem:[%s316] sm:$0xf]
      %v450 = vld [vmem:[%s316 + $0x4] sm:$0xf]
      %v451 = vld [vmem:[%s316 + $0x8] sm:$0xf]
      %v452 = vld [vmem:[%s316 + $0xc] sm:$0xf]
      %v453 = vld [vmem:[%s316 + $0x10] sm:$0xf]
      %v454 = vld [vmem:[%s316 + $0x14] sm:$0xf]
      %v455 = vld [vmem:[%s316 + $0x18] sm:$0xf]
      %v456 = vld [vmem:[%s316 + $0x1c] sm:$0xf]
      %v457 = vld [vmem:[%s3] sm:$0xf]
      %v458 = vld [vmem:[%s3 + $0x4] sm:$0xf]
      %v467 = vunpack.c.l.b16 %v449
      %v468 = vunpack.c.l.b16 %v450
      %v469 = vunpack.c.l.b16 %v451
      %v470 = vunpack.c.l.b16 %v452
      %v471 = vunpack.c.l.b16 %v453
      %v472 = vunpack.c.l.b16 %v454
      %v473 = vunpack.c.l.b16 %v455
      %v474 = vunpack.c.l.b16 %v456
      %v475 = vpack.c.b16 %v468, %v467
      %v476 = vpack.c.b16 %v470, %v469
      %v477 = vpack.c.b16 %v472, %v471
      %v478 = vpack.c.b16 %v474, %v473
      %v481 = vunpack.c.l.b16 %v457
      %v482 = vunpack.c.l.b16 %v458
      %v483 = vpack.c.b16 %v482, %v481
      %vm485 = vcmask 130048
      %v487 = vsel %vm485, %v475, 0
      %v490 = vsel %vm485, %v476, 0
      %v493 = vsel %vm485, %v477, 0
      %v496 = vsel %vm485, %v478, 0
      %498 = vmatpush.bf16.msra.mxu0 0
      %499 = vmatpush.bf16.msra.mxu0 0
      %500 = vmatpush.bf16.msra.mxu0 0
      %501 = vmatpush.bf16.msra.mxu0 0
      %502 = vmatpush.bf16.msra.mxu0 0
      %503 = vmatpush.bf16.msra.mxu0 0
      %504 = vmatpush.bf16.msra.mxu0 0
      %505 = vmatpush.bf16.msra.mxu0 %v483
      %506 = vmatmul.bf16.gmra.mxu0 %v487
      %v507 = vpop.f32.mrf.mxu0
      %v508 = vadd.f32 0.0, %v507
      %v509 = vpop.f32.mrf.mxu0
      %v510 = vadd.f32 0.0, %v509
      %511 = vmatmul.bf16.gmra.mxu0 %v490
      %v512 = vpop.f32.mrf.mxu0
      %v513 = vadd.f32 0.0, %v512
      %v514 = vpop.f32.mrf.mxu0
      %v515 = vadd.f32 0.0, %v514
      %516 = vmatmul.bf16.gmra.mxu0 %v493
      %v517 = vpop.f32.mrf.mxu0
      %v518 = vadd.f32 0.0, %v517
      %v519 = vpop.f32.mrf.mxu0
      %v520 = vadd.f32 0.0, %v519
      %521 = vmatmul.bf16.gmra.mxu0 %v496
      %v522 = vpop.f32.mrf.mxu0
      %v523 = vadd.f32 0.0, %v522
      %v524 = vpop.f32.mrf.mxu0
      %v525 = vadd.f32 0.0, %v524
      %526 = vdwg.mxu0
      %v527 = vpack.c.bf16 %v430, %v430
      %v528 = vpack.c.bf16 %v432, %v432
      %v529 = vpack.c.bf16 %v435, %v435
      %v530 = vpack.c.bf16 %v437, %v437
      %v531 = vpack.c.bf16 %v440, %v440
      %v532 = vpack.c.bf16 %v442, %v442
      %v533 = vpack.c.bf16 %v445, %v445
      %v534 = vpack.c.bf16 %v447, %v447
      %535 = vst [vmem:[%s322] sm:$0xf] %v527
      %536 = vst [vmem:[%s322 + $0x4] sm:$0xf] %v528
      %537 = vst [vmem:[%s322 + $0x8] sm:$0xf] %v529
      %538 = vst [vmem:[%s322 + $0xc] sm:$0xf] %v530
      %539 = vst [vmem:[%s322 + $0x10] sm:$0xf] %v531
      %540 = vst [vmem:[%s322 + $0x14] sm:$0xf] %v532
      %541 = vst [vmem:[%s322 + $0x18] sm:$0xf] %v533
      %542 = vst [vmem:[%s322 + $0x1c] sm:$0xf] %v534
      %v543 = vpack.c.bf16 %v508, %v508
      %v544 = vpack.c.bf16 %v510, %v510
      %v545 = vpack.c.bf16 %v513, %v513
      %v546 = vpack.c.bf16 %v515, %v515
      %v547 = vpack.c.bf16 %v518, %v518
      %v548 = vpack.c.bf16 %v520, %v520
      %v549 = vpack.c.bf16 %v523, %v523
      %v550 = vpack.c.bf16 %v525, %v525
      %551 = vst [vmem:[%s328] sm:$0xf] %v543
      %552 = vst [vmem:[%s328 + $0x4] sm:$0xf] %v544
      %553 = vst [vmem:[%s328 + $0x8] sm:$0xf] %v545
      %554 = vst [vmem:[%s328 + $0xc] sm:$0xf] %v546
      %555 = vst [vmem:[%s328 + $0x10] sm:$0xf] %v547
      %556 = vst [vmem:[%s328 + $0x14] sm:$0xf] %v548
      %557 = vst [vmem:[%s328 + $0x18] sm:$0xf] %v549
      %558 = vst [vmem:[%s328 + $0x1c] sm:$0xf] %v550
      %v559 = vadd.f32 %v430, %v432
      %v560 = vadd.f32 %v559, %v435
      %v561 = vadd.f32 %v560, %v437
      %v562 = vadd.f32 %v561, %v440
      %v563 = vadd.f32 %v562, %v442
      %v564 = vadd.f32 %v563, %v445
      %v565 = vadd.f32 %v564, %v447
      %v566 = vrot.slane %v565, 4
      %v567 = vadd.f32 %v565, %v566
      %v568 = vrot.slane %v567, 2
      %v569 = vadd.f32 %v567, %v568
      %v570 = vrot.slane %v569, 1
      %v571 = vadd.f32 %v569, %v570
      %v572 = vmul.f32 %v430, %v430
      %v573 = vmul.f32 %v432, %v432
      %v574 = vmul.f32 %v435, %v435
      %v575 = vmul.f32 %v437, %v437
      %v576 = vmul.f32 %v440, %v440
      %v577 = vmul.f32 %v442, %v442
      %v578 = vmul.f32 %v445, %v445
      %v579 = vmul.f32 %v447, %v447
      %v580 = vadd.f32 %v572, %v573
      %v581 = vadd.f32 %v580, %v574
      %v582 = vadd.f32 %v581, %v575
      %v583 = vadd.f32 %v582, %v576
      %v584 = vadd.f32 %v583, %v577
      %v585 = vadd.f32 %v584, %v578
      %v586 = vadd.f32 %v585, %v579
      %v587 = vrot.slane %v586, 4
      %v588 = vadd.f32 %v586, %v587
      %v589 = vrot.slane %v588, 2
      %v590 = vadd.f32 %v588, %v589
      %v591 = vrot.slane %v590, 1
      %v592 = vadd.f32 %v590, %v591
      %vm593 = vcmask 1040384
      %v594 = vsel %vm593, %v571, %v592
      %v595 = vadd.f32 %v508, %v510
      %v596 = vadd.f32 %v595, %v513
      %v597 = vadd.f32 %v596, %v515
      %v598 = vadd.f32 %v597, %v518
      %v599 = vadd.f32 %v598, %v520
      %v600 = vadd.f32 %v599, %v523
      %v601 = vadd.f32 %v600, %v525
      %v602 = vrot.slane %v601, 4
      %v603 = vadd.f32 %v601, %v602
      %v604 = vrot.slane %v603, 2
      %v605 = vadd.f32 %v603, %v604
      %v606 = vrot.slane %v605, 1
      %v607 = vadd.f32 %v605, %v606
      %v608 = vmul.f32 %v508, %v508
      %v609 = vmul.f32 %v510, %v510
      %v610 = vmul.f32 %v513, %v513
      %v611 = vmul.f32 %v515, %v515
      %v612 = vmul.f32 %v518, %v518
      %v613 = vmul.f32 %v520, %v520
      %v614 = vmul.f32 %v523, %v523
      %v615 = vmul.f32 %v525, %v525
      %v616 = vadd.f32 %v608, %v609
      %v617 = vadd.f32 %v616, %v610
      %v618 = vadd.f32 %v617, %v611
      %v619 = vadd.f32 %v618, %v612
      %v620 = vadd.f32 %v619, %v613
      %v621 = vadd.f32 %v620, %v614
      %v622 = vadd.f32 %v621, %v615
      %v623 = vrot.slane %v622, 4
      %v624 = vadd.f32 %v622, %v623
      %v625 = vrot.slane %v624, 2
      %v626 = vadd.f32 %v624, %v625
      %v627 = vrot.slane %v626, 1
      %v628 = vadd.f32 %v626, %v627
      %v629 = vsel %vm593, %v607, %v628
      %630 = vst [vmem:[%s333] sm:$0x3] %v594
      %631 = vst [vmem:[%s337] sm:$0x3] %v629
      %s632 = smul.u32 8, %s19
      %p633 = scmp.lt.s32.totalorder %s632, 15
      %s634 = scalar_select %p633, %s632, 15
      %s635 = smul.addr %s634, 4
      %s636 = scalar_lea.vmem %s4, %s635
      %s637 = smul.u32 8, %s19
      %p638 = scmp.lt.s32.totalorder %s637, 15
      %s639 = scalar_select %p638, %s637, 15
      %s640 = smul.addr %s639, 4
      %s641 = scalar_lea.vmem %s5, %s640
      %p642 = scmp.lt.s32.totalorder %s19, 1
      %s643 = scalar_select %p642, %s19, 1
      %s644 = smul.addr %s643, 2
      %s645 = scalar_lea.vmem %s6, %s644
      %p646 = scmp.lt.s32.totalorder %s19, 1
      %s647 = scalar_select %p646, %s19, 1
      %s648 = smul.addr %s647, 2
      %s649 = scalar_lea.vmem %s7, %s648
      // Predicated region
      $region37: #{basic_block_forward.6} parent=35 // pred_check
        %p650 = pneg %p131
      $region38: #{basic_block_forward.6} parent=35 // pred_check_branch
        %652 = sbr.rel (%p650) target = $region40
      $region39: #{basic_block_forward.6} parent=35 // pred_region
        %s653 = smul.u32 8, %s19
      $region40: #{basic_block_forward.6} parent=35 // pred_fallthru
        _
      // Predicated region
      $region41: #{basic_block_forward.6} parent=35 // pred_check
        %p654 = pneg %p157
      $region42: #{basic_block_forward.6} parent=35 // pred_check_branch
        %656 = sbr.rel (%p654) target = $region44
      $region43: #{basic_block_forward.6} parent=35 // pred_region
        %s657 = smul.u32 8, %s19
      $region44: #{basic_block_forward.6} parent=35 // pred_fallthru
        _
      // Predicated region
      $region45: #{basic_block_forward.6} parent=35 // pred_check
        %p658 = pneg %p183
      $region46: #{basic_block_forward.6} parent=35 // pred_check_branch
        %660 = sbr.rel (%p658) target = $region48
      $region47: #{basic_block_forward.6} parent=35 // pred_region
        _
      $region48: #{basic_block_forward.6} parent=35 // pred_fallthru
        _
      // Predicated region
      $region49: #{basic_block_forward.6} parent=35 // pred_check
        %p661 = pneg %p209
      $region50: #{basic_block_forward.6} parent=35 // pred_check_branch
        %663 = sbr.rel (%p661) target = $region52
      $region51: #{basic_block_forward.6} parent=35 // pred_region
        _
      $region52: #{basic_block_forward.6} parent=35 // pred_fallthru
        _
    $region36: #{basic_block_forward.6} parent=5 // pred_fallthru
      _
    %p664 = scmp.le.s32.totalorder 2, %s14
    // Predicated region
    $region53: #{basic_block_forward.6} parent=5 // pred_check
      %p665 = pneg %p664
    $region54: #{basic_block_forward.6} parent=5 // pred_check_branch
      %667 = sbr.rel (%p665) target = $region56
    $region55: #{basic_block_forward.6} parent=5 // pred_region
      %s668 = ssub.s32 %s14, 2
      // Predicated region
      $region57: #{basic_block_forward.6} parent=55 // pred_check
        %p669 = pneg %p137
      $region58: #{basic_block_forward.6} parent=55 // pred_check_branch
        %671 = sbr.rel (%p669) target = $region60
      $region59: #{basic_block_forward.6} parent=55 // pred_region
        %s672 = smul.u32 8, %s20
        %p673 = scmp.lt.s32.totalorder %s672, 15
        %s674 = scalar_select %p673, %s672, 15
        %s675 = smul.addr %s674, 4
        %s676 = scalar_lea.vmem %s4, %s675
      $region60: #{basic_block_forward.6} parent=55 // pred_fallthru
        _
      // Predicated region
      $region61: #{basic_block_forward.6} parent=55 // pred_check
        %p677 = pneg %p163
      $region62: #{basic_block_forward.6} parent=55 // pred_check_branch
        %679 = sbr.rel (%p677) target = $region64
      $region63: #{basic_block_forward.6} parent=55 // pred_region
        %s680 = smul.u32 8, %s20
        %p681 = scmp.lt.s32.totalorder %s680, 15
        %s682 = scalar_select %p681, %s680, 15
        %s683 = smul.addr %s682, 4
        %s684 = scalar_lea.vmem %s5, %s683
      $region64: #{basic_block_forward.6} parent=55 // pred_fallthru
        _
      // Predicated region
      $region65: #{basic_block_forward.6} parent=55 // pred_check
        %p685 = pneg %p189
      $region66: #{basic_block_forward.6} parent=55 // pred_check_branch
        %687 = sbr.rel (%p685) target = $region68
      $region67: #{basic_block_forward.6} parent=55 // pred_region
        %p688 = scmp.lt.s32.totalorder %s20, 1
        %s689 = scalar_select %p688, %s20, 1
        %s690 = smul.addr %s689, 2
        %s691 = scalar_lea.vmem %s6, %s690
      $region68: #{basic_block_forward.6} parent=55 // pred_fallthru
        _
      // Predicated region
      $region69: #{basic_block_forward.6} parent=55 // pred_check
        %p692 = pneg %p215
      $region70: #{basic_block_forward.6} parent=55 // pred_check_branch
        %694 = sbr.rel (%p692) target = $region72
      $region71: #{basic_block_forward.6} parent=55 // pred_region
        %p695 = scmp.lt.s32.totalorder %s20, 1
        %s696 = scalar_select %p695, %s20, 1
        %s697 = smul.addr %s696, 2
        %s698 = scalar_lea.vmem %s7, %s697
      $region72: #{basic_block_forward.6} parent=55 // pred_fallthru
        _
    $region56: #{basic_block_forward.6} parent=5 // pred_fallthru
      _
  $region6: #{basic_block_forward.6} parent=0 // loop_footer
    %s18 = sadd.s32 1, %s14
  $region7: #{basic_block_forward.6} parent=0 // loop_footer_branch
    %13 = sbr.rel target = $region3
  $region8: #{basic_block_forward.6} parent=0 // loop_exit
    _

</llo_original>
